<compile_context>
chip_gen: v7x
topology: tpu7x:2x2x1
jax: 0.10.0
libtpu: 0.0.40
codegen_flags: <defaults>
</compile_context>

<pallas_src>
import jax
import jax.numpy as jnp
from jax import lax
from jax.experimental import pallas as pl
from jax.experimental.pallas import tpu as pltpu


# ----------------------------------------------------------------------------
# Pallas kernel: fused down -> (folded concat) mid -> up*mult -> residual -> org linear
# ----------------------------------------------------------------------------
def _lllite_kernel(mult_ref, x_ref, cx_ref,
                   wd_ref, bd_ref,
                   wmc_ref, wmd_ref, bm_ref,
                   wu_ref, bu_ref,
                   wo_ref, bo_ref,
                   out_ref):
    x = x_ref[...]                                    # (TM, in_dim)  f32
    xb = x.astype(jnp.bfloat16)                       # bf16 for the MXU
    cx = cx_ref[...]                                  # (TM, Cp)      bf16

    # self.down : Linear + ReLU  (f32 accumulate, f32 bias/ReLU for v5e VPU)
    d = jnp.dot(xb, wd_ref[...], preferred_element_type=jnp.float32) + bd_ref[...]
    d = jnp.maximum(d, 0.0)                           # (TM, Mp) f32

    # self.mid : Linear(concat([cx, d])) + ReLU, concat folded into two matmuls
    m = (jnp.dot(cx, wmc_ref[...], preferred_element_type=jnp.float32)
         + jnp.dot(d.astype(jnp.bfloat16), wmd_ref[...], preferred_element_type=jnp.float32)
         + bm_ref[...])
    m = jnp.maximum(m, 0.0)                           # (TM, Mp) f32

    # self.up, then * multiplier (SMEM scalar, applied in-kernel)
    mult = mult_ref[0]
    u = (jnp.dot(m.astype(jnp.bfloat16), wu_ref[...], preferred_element_type=jnp.float32)
         + bu_ref[...]) * mult                        # (TM, in_dim) f32

    # org_forward(x + u) : original nn.Linear (residual add in f32)
    xp = (x + u).astype(jnp.bfloat16)
    out_ref[...] = (jnp.dot(xp, wo_ref[...], preferred_element_type=jnp.float32)
                    + bo_ref[...]).astype(out_ref.dtype)


# ----------------------------------------------------------------------------
# Parameter / cond prep (call ONCE per module, not per forward)
# ----------------------------------------------------------------------------
def _round_up(n, m=128):
    return ((n + m - 1) // m) * m


def _pad_cols(a, to):
    pad = to - a.shape[-1]
    return a if pad == 0 else jnp.pad(a, [(0, 0)] * (a.ndim - 1) + [(0, pad)])


def _pad_rows(a, to):
    pad = to - a.shape[0]
    return a if pad == 0 else jnp.pad(a, [(0, pad)] + [(0, 0)] * (a.ndim - 1))


def prepare_params(params):
    """Pad mlp/cond dims to 128 lanes, split w_mid, cast to bf16 (biases f32).
    Multiplier is NOT folded — it is passed to the kernel as an SMEM scalar."""
    in_dim, mlp_dim = params["w_down"].shape
    cond_emb_dim = params["w_mid"].shape[0] - mlp_dim
    out_dim = params["w_org"].shape[1]
    Mp = _round_up(mlp_dim)
    Cp = _round_up(cond_emb_dim)

    w_mid_cx = params["w_mid"][:cond_emb_dim, :]
    w_mid_d = params["w_mid"][cond_emb_dim:, :]

    bf = lambda a: a.astype(jnp.bfloat16)
    f32 = lambda a: a.astype(jnp.float32)

    pparams = dict(
        w_down=bf(_pad_cols(params["w_down"], Mp)),                 # (in_dim, Mp)
        b_down=f32(_pad_cols(params["b_down"], Mp)),                # (1, Mp)
        w_mid_cx=bf(_pad_cols(_pad_rows(w_mid_cx, Cp), Mp)),        # (Cp, Mp)
        w_mid_d=bf(_pad_cols(_pad_rows(w_mid_d, Mp), Mp)),          # (Mp, Mp)
        b_mid=f32(_pad_cols(params["b_mid"], Mp)),                  # (1, Mp)
        w_up=bf(_pad_rows(params["w_up"], Mp)),                     # (Mp, in_dim)
        b_up=f32(params["b_up"]),                                   # (1, in_dim)
        w_org=bf(params["w_org"]),                                  # (in_dim, out_dim)
        b_org=f32(params["b_org"]),                                 # (1, out_dim)
    )
    dims = dict(in_dim=in_dim, out_dim=out_dim, mlp_dim=mlp_dim,
                cond_emb_dim=cond_emb_dim, Mp=Mp, Cp=Cp)
    return pparams, dims


def prepare_cond(cond_emb, Cp):
    """Flatten + lane-pad + cast cond_emb once (equivalent of set_cond_image caching)."""
    Nc, Sc, cdim = cond_emb.shape
    cx2d = cond_emb.reshape(Nc * Sc, cdim)
    return _pad_cols(cx2d, Cp).astype(jnp.bfloat16)          # (Rc, Cp) bf16


# ----------------------------------------------------------------------------
# Wrapper: one pallas_call over row tiles of the flattened token axis
# ----------------------------------------------------------------------------
def lllite_forward_pallas(x, cx2d, pparams, dims, *, multiplier, tile_m=None,
                          vmem_budget_bytes=40 << 20):
    """x: (N, S, in_dim) f32; cx2d: (Rc, Cp) bf16 with Rc == N*S or (N//2)*S."""
    N, S, in_dim = x.shape
    out_dim, Mp, Cp = dims["out_dim"], dims["Mp"], dims["Cp"]
    assert in_dim == dims["in_dim"]
    assert in_dim % 128 == 0 and out_dim % 128 == 0, "SDXL dims are 128-multiples"
    assert cx2d.shape[1] == Cp

    R = N * S                       # total token rows
    Rc = cx2d.shape[0]              # cond rows; row r of x pairs with cond row (r % Rc)
    assert R % Rc == 0 and (R // Rc) in (1, 2)

    weights = (pparams["w_down"], pparams["b_down"], pparams["w_mid_cx"],
               pparams["w_mid_d"], pparams["b_mid"], pparams["w_up"],
               pparams["b_up"], pparams["w_org"], pparams["b_org"])
    weights_bytes = sum(int(w.size) * w.dtype.itemsize for w in weights)

    def step_bytes(t):
        # double-buffered per-step tiles: x (f32) + cx (bf16) + out (bf16)
        return 2 * t * (in_dim * 4 + Cp * 2 + out_dim * 2)

    if tile_m is None:
        start = max(8, (min(1024, Rc) // 8) * 8)
        for t in range(start, 7, -8):
            if Rc % t == 0 and weights_bytes + step_bytes(t) <= vmem_budget_bytes:
                tile_m = t
                break
        if tile_m is None:
            raise ValueError(
                "could not find a tile_m: cond row count needs a multiple-of-8 divisor")
    assert Rc % tile_m == 0 and R % tile_m == 0
    nc_blocks = Rc // tile_m

    # Real footprint + headroom for compiler scratch; cap <= 48 MiB (safe on v7x 64 MiB).
    vmem_limit = int(min(max(weights_bytes + step_bytes(tile_m) + (8 << 20), 32 << 20),
                         48 << 20))

    x2d = x.reshape(R, in_dim)                             # f32, cast to bf16 in-kernel
    mult = jnp.full((1,), multiplier, dtype=jnp.float32)   # SMEM scalar

    # Constant weights: single-buffered residents (DMA'd once, no double-buffer waste).
    resident = lambda shape: pl.BlockSpec(shape, lambda i: (0, 0),
                                          pipeline_mode=pl.Buffered(1))

    out2d = pl.pallas_call(
        _lllite_kernel,
        out_shape=jax.ShapeDtypeStruct((R, out_dim), jnp.bfloat16),
        grid_spec=pltpu.PrefetchScalarGridSpec(
            num_scalar_prefetch=0,
            grid=(R // tile_m,),
            in_specs=[
                pl.BlockSpec(memory_space=pltpu.MemorySpace.SMEM),           # multiplier
                pl.BlockSpec((tile_m, in_dim), lambda i: (i, 0)),            # x rows (f32)
                pl.BlockSpec((tile_m, Cp), lambda i: (i % nc_blocks, 0)),    # cond rows (wrapped)
                resident((in_dim, Mp)),        # w_down
                resident((1, Mp)),             # b_down
                resident((Cp, Mp)),            # w_mid_cx
                resident((Mp, Mp)),            # w_mid_d
                resident((1, Mp)),             # b_mid
                resident((Mp, in_dim)),        # w_up
                resident((1, in_dim)),         # b_up
                resident((in_dim, out_dim)),   # w_org
                resident((1, out_dim)),        # b_org
            ],
            out_specs=pl.BlockSpec((tile_m, out_dim), lambda i: (i, 0)),
        ),
        compiler_params=pltpu.CompilerParams(
            dimension_semantics=("parallel",),
            vmem_limit_bytes=vmem_limit,
        ),
    )(mult, x2d, cx2d,
      pparams["w_down"], pparams["b_down"],
      pparams["w_mid_cx"], pparams["w_mid_d"], pparams["b_mid"],
      pparams["w_up"], pparams["b_up"],
      pparams["w_org"], pparams["b_org"])
    return out2d.reshape(N, S, out_dim)


# ----------------------------------------------------------------------------
# Glue: conditioning1 (set_cond_image) in plain JAX
# ----------------------------------------------------------------------------
def conditioning1(cond_image, cparams):
    """depth=1: Conv2d(3, C/2, k4 s4) -> ReLU -> Conv2d(C/2, C, k2 s2). NCHW."""
    dn = ("NCHW", "OIHW", "NCHW")
    y = lax.conv_general_dilated(cond_image, cparams["c1_w"], (4, 4), "VALID",
                                 dimension_numbers=dn) + cparams["c1_b"][None, :, None, None]
    y = jnp.maximum(y, 0.0)
    y = lax.conv_general_dilated(y, cparams["c2_w"], (2, 2), "VALID",
                                 dimension_numbers=dn) + cparams["c2_b"][None, :, None, None]
    n, c, h, w = y.shape
    return jnp.transpose(y.reshape(n, c, h * w), (0, 2, 1))   # (n, h*w, c)


# ----------------------------------------------------------------------------
# References
# ----------------------------------------------------------------------------
def reference_forward_f32(x, cond_emb, params, *, multiplier):
    """Pure f32 reference of LLLiteModule.forward (Linear case, eval mode)."""
    N = x.shape[0]
    cx = cond_emb
    if N // 2 == cx.shape[0]:                       # not batch_cond_only branch
        cx = jnp.tile(cx, (2, 1, 1))                # cx.repeat(2, 1, 1)
    d = jnp.maximum(x @ params["w_down"] + params["b_down"], 0.0)
    cat = jnp.concatenate([cx, d], axis=2)
    m = jnp.maximum(cat @ params["w_mid"] + params["b_mid"], 0.0)
    u = (m @ params["w_up"] + params["b_up"]) * multiplier
    return (x + u) @ params["w_org"] + params["b_org"]


def reference_forward_bf16(x, cx2d, pparams, *, multiplier):
    """Plain-JAX reference mirroring the kernel's exact bf16/f32 cast pattern."""
    N, S, in_dim = x.shape
    R = N * S
    Rc = cx2d.shape[0]
    x2d = x.reshape(R, in_dim)
    cx = jnp.tile(cx2d, (R // Rc, 1))
    dot = lambda a, b: jnp.dot(a, b, preferred_element_type=jnp.float32)
    xb = x2d.astype(jnp.bfloat16)
    d = jnp.maximum(dot(xb, pparams["w_down"]) + pparams["b_down"], 0.0)
    m = jnp.maximum(dot(cx, pparams["w_mid_cx"])
                    + dot(d.astype(jnp.bfloat16), pparams["w_mid_d"])
                    + pparams["b_mid"], 0.0)
    u = (dot(m.astype(jnp.bfloat16), pparams["w_up"]) + pparams["b_up"]) * multiplier
    xp = (x2d + u).astype(jnp.bfloat16)
    out = (dot(xp, pparams["w_org"]) + pparams["b_org"]).astype(jnp.bfloat16)
    return out.reshape(N, S, -1)


# ----------------------------------------------------------------------------
if __name__ == "__main__":
    # Small-but-lane-friendly config (depth=1 conditioning => /8 spatial downsample)
    N, S = 2, 256                    # 16x16 latent tokens
    in_dim = 128                     # org nn.Linear in_features (SDXL dims are 128-multiples)
    out_dim = 128
    cond_emb_dim, mlp_dim = 32, 32   # padded to 128 lanes inside the wrapper
    multiplier = 0.75
    Hc = Wc = 128                    # cond image 128x128 -> 16x16 = 256 tokens = S

    key = jax.random.PRNGKey(0)
    ks = jax.random.split(key, 12)

    def init(k, shape, scale=0.05):
        return (scale * jax.random.normal(k, shape)).astype(jnp.float32)

    # Module parameters.  NOTE: the real __init__ zero-inits self.up[0].weight;
    # we use small random values so the whole fused path is numerically exercised.
    params = {
        "w_down": init(ks[0], (in_dim, mlp_dim)),
        "b_down": init(ks[1], (1, mlp_dim)),
        "w_mid":  init(ks[2], (cond_emb_dim + mlp_dim, mlp_dim)),
        "b_mid":  init(ks[3], (1, mlp_dim)),
        "w_up":   init(ks[4], (mlp_dim, in_dim)),
        "b_up":   init(ks[5], (1, in_dim)),
        "w_org":  init(ks[6], (in_dim, out_dim)),
        "b_org":  init(ks[7], (1, out_dim)),
    }
    cparams = {
        "c1_w": init(ks[8], (cond_emb_dim // 2, 3, 4, 4)),
        "c1_b": init(ks[9], (cond_emb_dim // 2,)),
        "c2_w": init(ks[10], (cond_emb_dim, cond_emb_dim // 2, 2, 2)),
        "c2_b": init(ks[11], (cond_emb_dim,)),
    }

    # Inputs
    kx, kc = jax.random.split(jax.random.PRNGKey(42))
    x = jax.random.normal(kx, (N, S, in_dim), dtype=jnp.float32)
    cond_image = jax.random.normal(kc, (1, 3, Hc, Wc), dtype=jnp.float32)  # NCHW

    # One-time prep (equivalent of __init__ / set_cond_image): cached, not per-forward.
    pparams, dims = prepare_params(params)
    cond_emb = conditioning1(cond_image, cparams)            # (1, S, cond_emb_dim)
    assert cond_emb.shape == (1, S, cond_emb_dim)
    cx2d = prepare_cond(cond_emb, dims["Cp"])                 # (S, Cp) bf16, padded

    # forward: the x.shape[0]//2 == cx.shape[0] duplication is handled inside the
    # kernel via the wrapping cx index_map (no jnp.tile / extra HBM traffic).
    out = lllite_forward_pallas(x, cx2d, pparams, dims, multiplier=multiplier)
    jax.block_until_ready(out)

    # Tight check vs. a reference with identical bf16/f32 cast pattern.
    ref_bf16 = reference_forward_bf16(x, cx2d, pparams, multiplier=multiplier)
    out_f = out.astype(jnp.float32)
    ref1_f = ref_bf16.astype(jnp.float32)
    err1 = jnp.max(jnp.abs(out_f - ref1_f))
    assert jnp.allclose(out_f, ref1_f, atol=2e-2, rtol=2e-2), f"bf16-matched mismatch: {err1}"

    # Sanity check vs. the pure f32 original-module semantics (bf16 quantization slack).
    ref_f32 = reference_forward_f32(x, cond_emb, params, multiplier=multiplier)
    err2 = jnp.max(jnp.abs(out_f - ref_f32))
    assert jnp.allclose(out_f, ref_f32, atol=1e-1, rtol=1e-1), f"f32 sanity mismatch: {err2}"

    print("KERNEL_OK")
</pallas_src>

<mosaic_0001>
module attributes {stable_mosaic.version = 11 : i64} {
  func.func @_lllite_kernel(%arg0: i32, %arg1: memref<1xf32, #tpu.memory_space<smem>>, %arg2: memref<256x128xf32, #tpu.memory_space<vmem>>, %arg3: memref<256x128xbf16, #tpu.memory_space<vmem>>, %arg4: memref<128x128xbf16, #tpu.memory_space<vmem>>, %arg5: memref<1x128xf32, #tpu.memory_space<vmem>>, %arg6: memref<128x128xbf16, #tpu.memory_space<vmem>>, %arg7: memref<128x128xbf16, #tpu.memory_space<vmem>>, %arg8: memref<1x128xf32, #tpu.memory_space<vmem>>, %arg9: memref<128x128xbf16, #tpu.memory_space<vmem>>, %arg10: memref<1x128xf32, #tpu.memory_space<vmem>>, %arg11: memref<128x128xbf16, #tpu.memory_space<vmem>>, %arg12: memref<1x128xf32, #tpu.memory_space<vmem>>, %arg13: memref<256x128xbf16, #tpu.memory_space<vmem>>) attributes {dimension_semantics = [#tpu.dimension_semantics<parallel>], iteration_bounds = array<i64: 2>, scalar_prefetch = 0 : i64, scratch_operands = 0 : i64, tpu.core_type = #tpu.core_type<tc>, window_params = [{transform_indices = @transform_0, window_bounds = array<i64: 1>}, {transform_indices = @transform_1, window_bounds = array<i64: 256, 128>}, {transform_indices = @transform_2, window_bounds = array<i64: 256, 128>}, {pipeline_mode = #tpu.pipeline_mode<synchronous>, transform_indices = @transform_3, window_bounds = array<i64: 128, 128>}, {pipeline_mode = #tpu.pipeline_mode<synchronous>, transform_indices = @transform_4, window_bounds = array<i64: 1, 128>}, {pipeline_mode = #tpu.pipeline_mode<synchronous>, transform_indices = @transform_5, window_bounds = array<i64: 128, 128>}, {pipeline_mode = #tpu.pipeline_mode<synchronous>, transform_indices = @transform_6, window_bounds = array<i64: 128, 128>}, {pipeline_mode = #tpu.pipeline_mode<synchronous>, transform_indices = @transform_7, window_bounds = array<i64: 1, 128>}, {pipeline_mode = #tpu.pipeline_mode<synchronous>, transform_indices = @transform_8, window_bounds = array<i64: 128, 128>}, {pipeline_mode = #tpu.pipeline_mode<synchronous>, transform_indices = @transform_9, window_bounds = array<i64: 1, 128>}, {pipeline_mode = #tpu.pipeline_mode<synchronous>, transform_indices = @transform_10, window_bounds = array<i64: 128, 128>}, {pipeline_mode = #tpu.pipeline_mode<synchronous>, transform_indices = @transform_11, window_bounds = array<i64: 1, 128>}, {transform_indices = @transform_12, window_bounds = array<i64: 256, 128>}]} {
    %c0 = arith.constant 0 : index
    %c0_0 = arith.constant 0 : index
    %0 = vector.load %arg2[%c0, %c0_0] : memref<256x128xf32, #tpu.memory_space<vmem>>, vector<256x128xf32>
    %1 = arith.truncf %0 : vector<256x128xf32> to vector<256x128xbf16>
    %c0_1 = arith.constant 0 : index
    %c0_2 = arith.constant 0 : index
    %2 = vector.load %arg3[%c0_1, %c0_2] : memref<256x128xbf16, #tpu.memory_space<vmem>>, vector<256x128xbf16>
    %c0_3 = arith.constant 0 : index
    %c0_4 = arith.constant 0 : index
    %3 = vector.load %arg4[%c0_3, %c0_4] : memref<128x128xbf16, #tpu.memory_space<vmem>>, vector<128x128xbf16>
    %cst = arith.constant dense<0.000000e+00> : vector<256x128xf32>
    %4 = tpu.matmul %1, %3, %cst {dimension_numbers = #tpu.dot_dimension_numbers<[1], [0], [0], [1], [0, 0, 1, 1], [], []>} : vector<256x128xbf16>, vector<128x128xbf16>, vector<256x128xf32> -> vector<256x128xf32>
    %c0_5 = arith.constant 0 : index
    %c0_6 = arith.constant 0 : index
    %5 = vector.load %arg5[%c0_5, %c0_6] : memref<1x128xf32, #tpu.memory_space<vmem>>, vector<1x128xf32>
    %6 = vector.broadcast %5 : vector<1x128xf32> to vector<256x128xf32>
    %7 = arith.addf %4, %6 : vector<256x128xf32>
    %cst_7 = arith.constant 0.000000e+00 : f32
    %8 = vector.broadcast %cst_7 : f32 to vector<256x128xf32>
    %9 = arith.maximumf %7, %8 : vector<256x128xf32>
    %c0_8 = arith.constant 0 : index
    %c0_9 = arith.constant 0 : index
    %10 = vector.load %arg6[%c0_8, %c0_9] : memref<128x128xbf16, #tpu.memory_space<vmem>>, vector<128x128xbf16>
    %cst_10 = arith.constant dense<0.000000e+00> : vector<256x128xf32>
    %11 = tpu.matmul %2, %10, %cst_10 {dimension_numbers = #tpu.dot_dimension_numbers<[1], [0], [0], [1], [0, 0, 1, 1], [], []>} : vector<256x128xbf16>, vector<128x128xbf16>, vector<256x128xf32> -> vector<256x128xf32>
    %12 = arith.truncf %9 : vector<256x128xf32> to vector<256x128xbf16>
    %c0_11 = arith.constant 0 : index
    %c0_12 = arith.constant 0 : index
    %13 = vector.load %arg7[%c0_11, %c0_12] : memref<128x128xbf16, #tpu.memory_space<vmem>>, vector<128x128xbf16>
    %cst_13 = arith.constant dense<0.000000e+00> : vector<256x128xf32>
    %14 = tpu.matmul %12, %13, %cst_13 {dimension_numbers = #tpu.dot_dimension_numbers<[1], [0], [0], [1], [0, 0, 1, 1], [], []>} : vector<256x128xbf16>, vector<128x128xbf16>, vector<256x128xf32> -> vector<256x128xf32>
    %15 = arith.addf %11, %14 : vector<256x128xf32>
    %c0_14 = arith.constant 0 : index
    %c0_15 = arith.constant 0 : index
    %16 = vector.load %arg8[%c0_14, %c0_15] : memref<1x128xf32, #tpu.memory_space<vmem>>, vector<1x128xf32>
    %17 = vector.broadcast %16 : vector<1x128xf32> to vector<256x128xf32>
    %18 = arith.addf %15, %17 : vector<256x128xf32>
    %cst_16 = arith.constant 0.000000e+00 : f32
    %19 = vector.broadcast %cst_16 : f32 to vector<256x128xf32>
    %20 = arith.maximumf %18, %19 : vector<256x128xf32>
    %c0_17 = arith.constant 0 : index
    %21 = memref.load %arg1[%c0_17] : memref<1xf32, #tpu.memory_space<smem>>
    %22 = arith.truncf %20 : vector<256x128xf32> to vector<256x128xbf16>
    %c0_18 = arith.constant 0 : index
    %c0_19 = arith.constant 0 : index
    %23 = vector.load %arg9[%c0_18, %c0_19] : memref<128x128xbf16, #tpu.memory_space<vmem>>, vector<128x128xbf16>
    %cst_20 = arith.constant dense<0.000000e+00> : vector<256x128xf32>
    %24 = tpu.matmul %22, %23, %cst_20 {dimension_numbers = #tpu.dot_dimension_numbers<[1], [0], [0], [1], [0, 0, 1, 1], [], []>} : vector<256x128xbf16>, vector<128x128xbf16>, vector<256x128xf32> -> vector<256x128xf32>
    %c0_21 = arith.constant 0 : index
    %c0_22 = arith.constant 0 : index
    %25 = vector.load %arg10[%c0_21, %c0_22] : memref<1x128xf32, #tpu.memory_space<vmem>>, vector<1x128xf32>
    %26 = vector.broadcast %25 : vector<1x128xf32> to vector<256x128xf32>
    %27 = arith.addf %24, %26 : vector<256x128xf32>
    %28 = vector.broadcast %21 : f32 to vector<256x128xf32>
    %29 = arith.mulf %27, %28 : vector<256x128xf32>
    %30 = arith.addf %0, %29 : vector<256x128xf32>
    %31 = arith.truncf %30 : vector<256x128xf32> to vector<256x128xbf16>
    %c0_23 = arith.constant 0 : index
    %c0_24 = arith.constant 0 : index
    %32 = vector.load %arg11[%c0_23, %c0_24] : memref<128x128xbf16, #tpu.memory_space<vmem>>, vector<128x128xbf16>
    %cst_25 = arith.constant dense<0.000000e+00> : vector<256x128xf32>
    %33 = tpu.matmul %31, %32, %cst_25 {dimension_numbers = #tpu.dot_dimension_numbers<[1], [0], [0], [1], [0, 0, 1, 1], [], []>} : vector<256x128xbf16>, vector<128x128xbf16>, vector<256x128xf32> -> vector<256x128xf32>
    %c0_26 = arith.constant 0 : index
    %c0_27 = arith.constant 0 : index
    %34 = vector.load %arg12[%c0_26, %c0_27] : memref<1x128xf32, #tpu.memory_space<vmem>>, vector<1x128xf32>
    %35 = vector.broadcast %34 : vector<1x128xf32> to vector<256x128xf32>
    %36 = arith.addf %33, %35 : vector<256x128xf32>
    %37 = arith.truncf %36 : vector<256x128xf32> to vector<256x128xbf16>
    %c0_28 = arith.constant 0 : index
    %c0_29 = arith.constant 0 : index
    %38 = vector.load %arg13[%c0_28, %c0_29] : memref<256x128xbf16, #tpu.memory_space<vmem>>, vector<256x128xbf16>
    tpu.vector_store %arg13[%c0_28, %c0_29], %37 {strides = array<i32>} : memref<256x128xbf16, #tpu.memory_space<vmem>>, vector<256x128xbf16>,
    return
  }
  func.func @transform_0(%arg0: i32) -> i32 {
    %c0_i32 = arith.constant 0 : i32
    %c0_i32_0 = arith.constant 0 : i32
    return %c0_i32 : i32
  }
  func.func @transform_1(%arg0: i32) -> (i32, i32) {
    %c0_i32 = arith.constant 0 : i32
    %c0_i32_0 = arith.constant 0 : i32
    return %arg0, %c0_i32 : i32, i32
  }
  func.func @transform_2(%arg0: i32) -> (i32, i32) {
    %c1_i32 = arith.constant 1 : i32
    %c0_i32 = arith.constant 0 : i32
    %0 = arith.cmpi eq, %c1_i32, %c0_i32 : i32
    %c1_i32_0 = arith.constant 1 : i32
    %1 = arith.select %0, %c1_i32_0, %c1_i32 : i32
    %2 = arith.remsi %arg0, %1 : i32
    %c0_i32_1 = arith.constant 0 : i32
    %3 = arith.cmpi ne, %2, %c0_i32_1 : i32
    %c0_i32_2 = arith.constant 0 : i32
    %4 = arith.cmpi slt, %2, %c0_i32_2 : i32
    %c0_i32_3 = arith.constant 0 : i32
    %5 = arith.cmpi slt, %1, %c0_i32_3 : i32
    %6 = arith.xori %4, %5 : i1
    %7 = arith.andi %6, %3 : i1
    %8 = arith.addi %2, %1 : i32
    %9 = arith.select %7, %8, %2 : i32
    %c0_i32_4 = arith.constant 0 : i32
    %c0_i32_5 = arith.constant 0 : i32
    return %9, %c0_i32_4 : i32, i32
  }
  func.func @transform_3(%arg0: i32) -> (i32, i32) {
    %c0_i32 = arith.constant 0 : i32
    %c0_i32_0 = arith.constant 0 : i32
    %c0_i32_1 = arith.constant 0 : i32
    return %c0_i32, %c0_i32_0 : i32, i32
  }
  func.func @transform_4(%arg0: i32) -> (i32, i32) {
    %c0_i32 = arith.constant 0 : i32
    %c0_i32_0 = arith.constant 0 : i32
    %c0_i32_1 = arith.constant 0 : i32
    return %c0_i32, %c0_i32_0 : i32, i32
  }
  func.func @transform_5(%arg0: i32) -> (i32, i32) {
    %c0_i32 = arith.constant 0 : i32
    %c0_i32_0 = arith.constant 0 : i32
    %c0_i32_1 = arith.constant 0 : i32
    return %c0_i32, %c0_i32_0 : i32, i32
  }
  func.func @transform_6(%arg0: i32) -> (i32, i32) {
    %c0_i32 = arith.constant 0 : i32
    %c0_i32_0 = arith.constant 0 : i32
    %c0_i32_1 = arith.constant 0 : i32
    return %c0_i32, %c0_i32_0 : i32, i32
  }
  func.func @transform_7(%arg0: i32) -> (i32, i32) {
    %c0_i32 = arith.constant 0 : i32
    %c0_i32_0 = arith.constant 0 : i32
    %c0_i32_1 = arith.constant 0 : i32
    return %c0_i32, %c0_i32_0 : i32, i32
  }
  func.func @transform_8(%arg0: i32) -> (i32, i32) {
    %c0_i32 = arith.constant 0 : i32
    %c0_i32_0 = arith.constant 0 : i32
    %c0_i32_1 = arith.constant 0 : i32
    return %c0_i32, %c0_i32_0 : i32, i32
  }
  func.func @transform_9(%arg0: i32) -> (i32, i32) {
    %c0_i32 = arith.constant 0 : i32
    %c0_i32_0 = arith.constant 0 : i32
    %c0_i32_1 = arith.constant 0 : i32
    return %c0_i32, %c0_i32_0 : i32, i32
  }
  func.func @transform_10(%arg0: i32) -> (i32, i32) {
    %c0_i32 = arith.constant 0 : i32
    %c0_i32_0 = arith.constant 0 : i32
    %c0_i32_1 = arith.constant 0 : i32
    return %c0_i32, %c0_i32_0 : i32, i32
  }
  func.func @transform_11(%arg0: i32) -> (i32, i32) {
    %c0_i32 = arith.constant 0 : i32
    %c0_i32_0 = arith.constant 0 : i32
    %c0_i32_1 = arith.constant 0 : i32
    return %c0_i32, %c0_i32_0 : i32, i32
  }
  func.func @transform_12(%arg0: i32) -> (i32, i32) {
    %c0_i32 = arith.constant 0 : i32
    %c0_i32_0 = arith.constant 0 : i32
    return %arg0, %c0_i32 : i32, i32
  }
}

</mosaic_0001>

<llo_original>
// kernel: tpu_custom_call.1
$region0: #{tpu_custom_call.1}
  #allocation0 [shape = 'u32[]', space=smem, size = 0x4, offset = 0x4, fixed_abs, tag = 'smem constant byte address 0x4 - core index']
  #allocation1 [shape = 'u32[144,128]{1,0:T(1,128)}', space=vmem, size = 0x12000, scoped, tag = 'internal scratch']
  #allocation2 [shape = 'f32[1]{0:T(128)S(6)}', space=smem, size = 0x200, scoped, tag = 'scoped memory for tpu_custom_call.1']
  %s0 = inlined_call_operand.<no memory space> [shape: f32[1], index: 0, kind: input, shape index: {}]
  %s1 = inlined_call_operand.hbm [shape: f32[512,128], index: 1, kind: input, shape index: {}]
  %s2 = inlined_call_operand.hbm [shape: bf16[256,128], index: 2, kind: input, shape index: {}]
  %s3 = inlined_call_operand.hbm [shape: bf16[128,128], index: 3, kind: input, shape index: {}]
  %s4 = inlined_call_operand.vmem [shape: f32[1,128], index: 4, kind: input, shape index: {}]
  %s5 = inlined_call_operand.hbm [shape: bf16[128,128], index: 5, kind: input, shape index: {}]
  %s6 = inlined_call_operand.hbm [shape: bf16[128,128], index: 6, kind: input, shape index: {}]
  %s7 = inlined_call_operand.vmem [shape: f32[1,128], index: 7, kind: input, shape index: {}]
  %s8 = inlined_call_operand.hbm [shape: bf16[128,128], index: 8, kind: input, shape index: {}]
  %s9 = inlined_call_operand.vmem [shape: f32[1,128], index: 9, kind: input, shape index: {}]
  %s10 = inlined_call_operand.hbm [shape: bf16[128,128], index: 10, kind: input, shape index: {}]
  %s11 = inlined_call_operand.vmem [shape: f32[1,128], index: 11, kind: input, shape index: {}]
  %s12 = inlined_call_operand.hbm [shape: bf16[512,128], index: 12, kind: output, shape index: {}]
  %s13 = sld [smem:[#allocation0]]
  $region109: #{tpu_custom_call.1} parent=0
    _
  %s15 = ssub.s32 1, %s13
  %s16 = scalar_select 0, %s15, %s13
  %17 = sst [smem:[#allocation2]] %s0
  $region1: #{tpu_custom_call.1} parent=0
    #allocation3 [shape = 'u8[262144]{0}', space=vmem, size = 0x40000, scoped, tag = 'input window, operand 1']
    #allocation4 [shape = 's32[2]{0}', space=sflag, size = 0x8, scoped, tag = 'scoped memory for tpu_custom_call.1']
    #allocation5 [shape = 's32[2]{0}', space=sflag, size = 0x8, scoped, tag = 'scoped memory for tpu_custom_call.1']
    #allocation6 [shape = 'u8[65536]{0}', space=vmem, size = 0x10000, scoped, tag = 'input window, operand 2, single buffered']
    #allocation7 [shape = 's32[1]{0}', space=sflag, size = 0x4, scoped, tag = 'scoped memory for tpu_custom_call.1']
    #allocation8 [shape = 'u8[32768]{0}', space=vmem, size = 0x8000, scoped, tag = 'input window, operand 3, single buffered']
    #allocation9 [shape = 'u8[32768]{0}', space=vmem, size = 0x8000, scoped, tag = 'input window, operand 5, single buffered']
    #allocation10 [shape = 's32[1]{0}', space=sflag, size = 0x4, scoped, tag = 'scoped memory for tpu_custom_call.1']
    #allocation11 [shape = 'u8[32768]{0}', space=vmem, size = 0x8000, scoped, tag = 'input window, operand 6, single buffered']
    #allocation12 [shape = 'u8[32768]{0}', space=vmem, size = 0x8000, scoped, tag = 'input window, operand 8, single buffered']
    #allocation13 [shape = 's32[1]{0}', space=sflag, size = 0x4, scoped, tag = 'scoped memory for tpu_custom_call.1']
    #allocation14 [shape = 'u8[32768]{0}', space=vmem, size = 0x8000, scoped, tag = 'input window, operand 10, single buffered']
    #allocation15 [shape = 'u8[131072]{0}', space=vmem, size = 0x20000, scoped, tag = 'output window, operand 0']
    %18 = vsyncpa [#allocation4], 0
    %s19 = scalar_lea.sflag [#allocation4], 1
    %20 = vsyncpa %s19, 0
    %21 = vsyncpa [#allocation7], 0
    %22 = vsyncpa [#allocation10], 0
    %23 = vsyncpa [#allocation13], 0
    %24 = vsyncpa [#allocation5], 0
    %s25 = scalar_lea.sflag [#allocation5], 1
    %26 = vsyncpa %s25, 0
    loop: start=0, step=1, limit=4
    $region2: #{tpu_custom_call.1} parent=1 // loop_pre_header
      _
    $region3: #{tpu_custom_call.1} parent=1 // loop_header
      %s28 = sphi 0, %s32
      %p29 = scmp.ge.s32.totalorder %s28, 4
      %s36 = sphi 0, %s36
      %s38 = sphi 0, %s36
      %s39 = sphi 0, %s38
      %s53 = sphi 0, %s39
      %s59 = sphi 0, %s61
      %s62 = sphi 0, %s59
      %s63 = sphi 0, %s62
      %s79 = sphi 0, %s63
      %s83 = sphi 0, %s83
      %s85 = sphi 0, %s83
      %s86 = sphi 0, %s85
      %s100 = sphi 0, %s86
      %s104 = sphi 0, %s104
      %s106 = sphi 0, %s104
      %s107 = sphi 0, %s106
      %s121 = sphi 0, %s107
      %s125 = sphi 0, %s125
      %s127 = sphi 0, %s125
      %s128 = sphi 0, %s127
      %s142 = sphi 0, %s128
      %s146 = sphi 0, %s146
      %s148 = sphi 0, %s146
      %s149 = sphi 0, %s148
      %s163 = sphi 0, %s149
      %s167 = sphi 0, %s167
      %s169 = sphi 0, %s167
      %s170 = sphi 0, %s169
      %s184 = sphi 0, %s170
      %s188 = sphi 0, %s188
      %s190 = sphi 0, %s188
      %s191 = sphi 0, %s190
      %s205 = sphi 0, %s191
      %s209 = sphi 0, %s209
      %s211 = sphi 0, %s209
      %s212 = sphi 0, %s211
      %s226 = sphi 0, %s212
      %s230 = sphi 0, %s230
      %s232 = sphi 0, %s230
      %s233 = sphi 0, %s232
      %s247 = sphi 0, %s233
      %s251 = sphi 0, %s251
      %s253 = sphi 0, %s251
      %s254 = sphi 0, %s253
      %s268 = sphi 0, %s254
      %s272 = sphi 0, %s272
      %s274 = sphi 0, %s272
      %s275 = sphi 0, %s274
      %s289 = sphi 0, %s275
      %s295 = sphi 0, %s297
      %s298 = sphi 0, %s295
      %s299 = sphi 0, %s298
      %s315 = sphi 0, %s299
    $region4: #{tpu_custom_call.1} parent=1 // loop_header_branch
      %31 = sbr.rel (%p29) target = $region8
    $region5: #{tpu_custom_call.1} parent=1 // loop_body
      %s33 = ssub.s32 %s28, 1
      %s34 = ssub.s32 %s28, 2
      %s35 = sadd.s32 %s28, 1
      %s37 = sadd.s32 %s36, 1
      %p40 = scmp.eq.s32.totalorder %s28, 1
      %p41 = scmp.ne.s32.totalorder %s36, %s38
      %p42 = scmp.eq.s32.totalorder %s28, 0
      %p43 = por %p41, %p42
      %p44 = scmp.ne.s32.totalorder %s36, %s38
      %p45 = scmp.eq.s32.totalorder %s33, 1
      %p46 = por %p44, %p45
      %p47 = scmp.ne.s32.totalorder %s38, %s39
      %p48 = scmp.eq.s32.totalorder %s33, 0
      %p49 = por %p47, %p48
      %p50 = scmp.ne.s32.totalorder %s38, %s39
      %p51 = scmp.eq.s32.totalorder %s34, 1
      %p52 = por %p50, %p51
      %p54 = scmp.ne.s32.totalorder %s39, %s53
      %p55 = scmp.eq.s32.totalorder %s34, 0
      %p56 = por %p54, %p55
      %s57 = ssub.s32 %s28, %s35
      %p58 = scmp.eq.s32.totalorder %s57, 0
      %s60 = sadd.s32 %s59, 1
      %s61 = scalar_select %p58, %s59, %s60
      %p64 = pneg %p58
      %p65 = scmp.eq.s32.totalorder %s28, 1
      %p66 = por %p64, %p65
      %p67 = scmp.ne.s32.totalorder %s59, %s62
      %p68 = scmp.eq.s32.totalorder %s28, 0
      %p69 = por %p67, %p68
      %p70 = scmp.ne.s32.totalorder %s59, %s62
      %p71 = scmp.eq.s32.totalorder %s33, 1
      %p72 = por %p70, %p71
      %p73 = scmp.ne.s32.totalorder %s62, %s63
      %p74 = scmp.eq.s32.totalorder %s33, 0
      %p75 = por %p73, %p74
      %p76 = scmp.ne.s32.totalorder %s62, %s63
      %p77 = scmp.eq.s32.totalorder %s34, 1
      %p78 = por %p76, %p77
      %p80 = scmp.ne.s32.totalorder %s63, %s79
      %p81 = scmp.eq.s32.totalorder %s34, 0
      %p82 = por %p80, %p81
      %s84 = sadd.s32 %s83, 1
      %p87 = scmp.eq.s32.totalorder %s28, 1
      %p88 = scmp.ne.s32.totalorder %s83, %s85
      %p89 = scmp.eq.s32.totalorder %s28, 0
      %p90 = por %p88, %p89
      %p91 = scmp.ne.s32.totalorder %s83, %s85
      %p92 = scmp.eq.s32.totalorder %s33, 1
      %p93 = por %p91, %p92
      %p94 = scmp.ne.s32.totalorder %s85, %s86
      %p95 = scmp.eq.s32.totalorder %s33, 0
      %p96 = por %p94, %p95
      %p97 = scmp.ne.s32.totalorder %s85, %s86
      %p98 = scmp.eq.s32.totalorder %s34, 1
      %p99 = por %p97, %p98
      %p101 = scmp.ne.s32.totalorder %s86, %s100
      %p102 = scmp.eq.s32.totalorder %s34, 0
      %p103 = por %p101, %p102
      %s105 = sadd.s32 %s104, 1
      %p108 = scmp.eq.s32.totalorder %s28, 1
      %p109 = scmp.ne.s32.totalorder %s104, %s106
      %p110 = scmp.eq.s32.totalorder %s28, 0
      %p111 = por %p109, %p110
      %p112 = scmp.ne.s32.totalorder %s104, %s106
      %p113 = scmp.eq.s32.totalorder %s33, 1
      %p114 = por %p112, %p113
      %p115 = scmp.ne.s32.totalorder %s106, %s107
      %p116 = scmp.eq.s32.totalorder %s33, 0
      %p117 = por %p115, %p116
      %p118 = scmp.ne.s32.totalorder %s106, %s107
      %p119 = scmp.eq.s32.totalorder %s34, 1
      %p120 = por %p118, %p119
      %p122 = scmp.ne.s32.totalorder %s107, %s121
      %p123 = scmp.eq.s32.totalorder %s34, 0
      %p124 = por %p122, %p123
      %s126 = sadd.s32 %s125, 1
      %p129 = scmp.eq.s32.totalorder %s28, 1
      %p130 = scmp.ne.s32.totalorder %s125, %s127
      %p131 = scmp.eq.s32.totalorder %s28, 0
      %p132 = por %p130, %p131
      %p133 = scmp.ne.s32.totalorder %s125, %s127
      %p134 = scmp.eq.s32.totalorder %s33, 1
      %p135 = por %p133, %p134
      %p136 = scmp.ne.s32.totalorder %s127, %s128
      %p137 = scmp.eq.s32.totalorder %s33, 0
      %p138 = por %p136, %p137
      %p139 = scmp.ne.s32.totalorder %s127, %s128
      %p140 = scmp.eq.s32.totalorder %s34, 1
      %p141 = por %p139, %p140
      %p143 = scmp.ne.s32.totalorder %s128, %s142
      %p144 = scmp.eq.s32.totalorder %s34, 0
      %p145 = por %p143, %p144
      %s147 = sadd.s32 %s146, 1
      %p150 = scmp.eq.s32.totalorder %s28, 1
      %p151 = scmp.ne.s32.totalorder %s146, %s148
      %p152 = scmp.eq.s32.totalorder %s28, 0
      %p153 = por %p151, %p152
      %p154 = scmp.ne.s32.totalorder %s146, %s148
      %p155 = scmp.eq.s32.totalorder %s33, 1
      %p156 = por %p154, %p155
      %p157 = scmp.ne.s32.totalorder %s148, %s149
      %p158 = scmp.eq.s32.totalorder %s33, 0
      %p159 = por %p157, %p158
      %p160 = scmp.ne.s32.totalorder %s148, %s149
      %p161 = scmp.eq.s32.totalorder %s34, 1
      %p162 = por %p160, %p161
      %p164 = scmp.ne.s32.totalorder %s149, %s163
      %p165 = scmp.eq.s32.totalorder %s34, 0
      %p166 = por %p164, %p165
      %s168 = sadd.s32 %s167, 1
      %p171 = scmp.eq.s32.totalorder %s28, 1
      %p172 = scmp.ne.s32.totalorder %s167, %s169
      %p173 = scmp.eq.s32.totalorder %s28, 0
      %p174 = por %p172, %p173
      %p175 = scmp.ne.s32.totalorder %s167, %s169
      %p176 = scmp.eq.s32.totalorder %s33, 1
      %p177 = por %p175, %p176
      %p178 = scmp.ne.s32.totalorder %s169, %s170
      %p179 = scmp.eq.s32.totalorder %s33, 0
      %p180 = por %p178, %p179
      %p181 = scmp.ne.s32.totalorder %s169, %s170
      %p182 = scmp.eq.s32.totalorder %s34, 1
      %p183 = por %p181, %p182
      %p185 = scmp.ne.s32.totalorder %s170, %s184
      %p186 = scmp.eq.s32.totalorder %s34, 0
      %p187 = por %p185, %p186
      %s189 = sadd.s32 %s188, 1
      %p192 = scmp.eq.s32.totalorder %s28, 1
      %p193 = scmp.ne.s32.totalorder %s188, %s190
      %p194 = scmp.eq.s32.totalorder %s28, 0
      %p195 = por %p193, %p194
      %p196 = scmp.ne.s32.totalorder %s188, %s190
      %p197 = scmp.eq.s32.totalorder %s33, 1
      %p198 = por %p196, %p197
      %p199 = scmp.ne.s32.totalorder %s190, %s191
      %p200 = scmp.eq.s32.totalorder %s33, 0
      %p201 = por %p199, %p200
      %p202 = scmp.ne.s32.totalorder %s190, %s191
      %p203 = scmp.eq.s32.totalorder %s34, 1
      %p204 = por %p202, %p203
      %p206 = scmp.ne.s32.totalorder %s191, %s205
      %p207 = scmp.eq.s32.totalorder %s34, 0
      %p208 = por %p206, %p207
      %s210 = sadd.s32 %s209, 1
      %p213 = scmp.eq.s32.totalorder %s28, 1
      %p214 = scmp.ne.s32.totalorder %s209, %s211
      %p215 = scmp.eq.s32.totalorder %s28, 0
      %p216 = por %p214, %p215
      %p217 = scmp.ne.s32.totalorder %s209, %s211
      %p218 = scmp.eq.s32.totalorder %s33, 1
      %p219 = por %p217, %p218
      %p220 = scmp.ne.s32.totalorder %s211, %s212
      %p221 = scmp.eq.s32.totalorder %s33, 0
      %p222 = por %p220, %p221
      %p223 = scmp.ne.s32.totalorder %s211, %s212
      %p224 = scmp.eq.s32.totalorder %s34, 1
      %p225 = por %p223, %p224
      %p227 = scmp.ne.s32.totalorder %s212, %s226
      %p228 = scmp.eq.s32.totalorder %s34, 0
      %p229 = por %p227, %p228
      %s231 = sadd.s32 %s230, 1
      %p234 = scmp.eq.s32.totalorder %s28, 1
      %p235 = scmp.ne.s32.totalorder %s230, %s232
      %p236 = scmp.eq.s32.totalorder %s28, 0
      %p237 = por %p235, %p236
      %p238 = scmp.ne.s32.totalorder %s230, %s232
      %p239 = scmp.eq.s32.totalorder %s33, 1
      %p240 = por %p238, %p239
      %p241 = scmp.ne.s32.totalorder %s232, %s233
      %p242 = scmp.eq.s32.totalorder %s33, 0
      %p243 = por %p241, %p242
      %p244 = scmp.ne.s32.totalorder %s232, %s233
      %p245 = scmp.eq.s32.totalorder %s34, 1
      %p246 = por %p244, %p245
      %p248 = scmp.ne.s32.totalorder %s233, %s247
      %p249 = scmp.eq.s32.totalorder %s34, 0
      %p250 = por %p248, %p249
      %s252 = sadd.s32 %s251, 1
      %p255 = scmp.eq.s32.totalorder %s28, 1
      %p256 = scmp.ne.s32.totalorder %s251, %s253
      %p257 = scmp.eq.s32.totalorder %s28, 0
      %p258 = por %p256, %p257
      %p259 = scmp.ne.s32.totalorder %s251, %s253
      %p260 = scmp.eq.s32.totalorder %s33, 1
      %p261 = por %p259, %p260
      %p262 = scmp.ne.s32.totalorder %s253, %s254
      %p263 = scmp.eq.s32.totalorder %s33, 0
      %p264 = por %p262, %p263
      %p265 = scmp.ne.s32.totalorder %s253, %s254
      %p266 = scmp.eq.s32.totalorder %s34, 1
      %p267 = por %p265, %p266
      %p269 = scmp.ne.s32.totalorder %s254, %s268
      %p270 = scmp.eq.s32.totalorder %s34, 0
      %p271 = por %p269, %p270
      %s273 = sadd.s32 %s272, 1
      %p276 = scmp.eq.s32.totalorder %s28, 1
      %p277 = scmp.ne.s32.totalorder %s272, %s274
      %p278 = scmp.eq.s32.totalorder %s28, 0
      %p279 = por %p277, %p278
      %p280 = scmp.ne.s32.totalorder %s272, %s274
      %p281 = scmp.eq.s32.totalorder %s33, 1
      %p282 = por %p280, %p281
      %p283 = scmp.ne.s32.totalorder %s274, %s275
      %p284 = scmp.eq.s32.totalorder %s33, 0
      %p285 = por %p283, %p284
      %p286 = scmp.ne.s32.totalorder %s274, %s275
      %p287 = scmp.eq.s32.totalorder %s34, 1
      %p288 = por %p286, %p287
      %p290 = scmp.ne.s32.totalorder %s275, %s289
      %p291 = scmp.eq.s32.totalorder %s34, 0
      %p292 = por %p290, %p291
      %s293 = ssub.s32 %s28, %s35
      %p294 = scmp.eq.s32.totalorder %s293, 0
      %s296 = sadd.s32 %s295, 1
      %s297 = scalar_select %p294, %s295, %s296
      %p300 = pneg %p294
      %p301 = scmp.eq.s32.totalorder %s28, 1
      %p302 = por %p300, %p301
      %p303 = scmp.ne.s32.totalorder %s295, %s298
      %p304 = scmp.eq.s32.totalorder %s28, 0
      %p305 = por %p303, %p304
      %p306 = scmp.ne.s32.totalorder %s295, %s298
      %p307 = scmp.eq.s32.totalorder %s33, 1
      %p308 = por %p306, %p307
      %p309 = scmp.ne.s32.totalorder %s298, %s299
      %p310 = scmp.eq.s32.totalorder %s33, 0
      %p311 = por %p309, %p310
      %p312 = scmp.ne.s32.totalorder %s298, %s299
      %p313 = scmp.eq.s32.totalorder %s34, 1
      %p314 = por %p312, %p313
      %p316 = scmp.ne.s32.totalorder %s299, %s315
      %p317 = scmp.eq.s32.totalorder %s34, 0
      %p318 = por %p316, %p317
      %p319 = scmp.le.s32.totalorder 1, %s28
      %p320 = scmp.lt.s32.totalorder %s28, 3
      %p321 = pnand %p319, %p320
      %p322 = pneg %p321
      // Predicated region
      $region9: #{tpu_custom_call.1} parent=5 // pred_check
        _
      $region10: #{tpu_custom_call.1} parent=5 // pred_check_branch
        %324 = sbr.rel (%p321) target = $region12
      $region11: #{tpu_custom_call.1} parent=5 // pred_region
        %s325 = ssub.s32 %s28, 1
        // Predicated region
        $region13: #{tpu_custom_call.1} parent=11 // pred_check
          %p326 = pneg %p49
        $region14: #{tpu_custom_call.1} parent=11 // pred_check_branch
          %328 = sbr.rel (%p326) target = $region16
        $region15: #{tpu_custom_call.1} parent=11 // pred_region
          _
        $region16: #{tpu_custom_call.1} parent=11 // pred_fallthru
          _
        // Predicated region
        $region17: #{tpu_custom_call.1} parent=11 // pred_check
          %p329 = pneg %p96
        $region18: #{tpu_custom_call.1} parent=11 // pred_check_branch
          %331 = sbr.rel (%p329) target = $region20
        $region19: #{tpu_custom_call.1} parent=11 // pred_region
          %s333 = ssub.s32 2048, 2048
          %334 = vsyncadd [#allocation7], %s333
          %s335 = sshll.u32 [#allocation6], 4
          %s336 = int_to_ptr.vmem [resolvable:$true] %s335
          %341 = dma.hbm_to_vmem [thread:$0]  %s2, 2048, %s336, [#allocation7], 64, 64, 4
        $region20: #{tpu_custom_call.1} parent=11 // pred_fallthru
          _
        // Predicated region
        $region21: #{tpu_custom_call.1} parent=11 // pred_check
          %p342 = pneg %p117
        $region22: #{tpu_custom_call.1} parent=11 // pred_check_branch
          %344 = sbr.rel (%p342) target = $region24
        $region23: #{tpu_custom_call.1} parent=11 // pred_region
          %s346 = ssub.s32 1024, 1024
          %347 = vsyncadd [#allocation7], %s346
          %s348 = sshll.u32 [#allocation8], 4
          %s349 = int_to_ptr.vmem [resolvable:$true] %s348
          %354 = dma.hbm_to_vmem [thread:$0]  %s3, 1024, %s349, [#allocation7], 64, 64, 4
        $region24: #{tpu_custom_call.1} parent=11 // pred_fallthru
          _
        // Predicated region
        $region25: #{tpu_custom_call.1} parent=11 // pred_check
          %p355 = pneg %p138
        $region26: #{tpu_custom_call.1} parent=11 // pred_check_branch
          %357 = sbr.rel (%p355) target = $region28
        $region27: #{tpu_custom_call.1} parent=11 // pred_region
          _
        $region28: #{tpu_custom_call.1} parent=11 // pred_fallthru
          _
        // Predicated region
        $region29: #{tpu_custom_call.1} parent=11 // pred_check
          %p358 = pneg %p159
        $region30: #{tpu_custom_call.1} parent=11 // pred_check_branch
          %360 = sbr.rel (%p358) target = $region32
        $region31: #{tpu_custom_call.1} parent=11 // pred_region
          %s362 = ssub.s32 1024, 1024
          %363 = vsyncadd [#allocation10], %s362
          %s364 = sshll.u32 [#allocation9], 4
          %s365 = int_to_ptr.vmem [resolvable:$true] %s364
          %370 = dma.hbm_to_vmem [thread:$0]  %s5, 1024, %s365, [#allocation10], 64, 64, 4
        $region32: #{tpu_custom_call.1} parent=11 // pred_fallthru
          _
        // Predicated region
        $region33: #{tpu_custom_call.1} parent=11 // pred_check
          %p371 = pneg %p180
        $region34: #{tpu_custom_call.1} parent=11 // pred_check_branch
          %373 = sbr.rel (%p371) target = $region36
        $region35: #{tpu_custom_call.1} parent=11 // pred_region
          %s375 = ssub.s32 1024, 1024
          %376 = vsyncadd [#allocation10], %s375
          %s377 = sshll.u32 [#allocation11], 4
          %s378 = int_to_ptr.vmem [resolvable:$true] %s377
          %383 = dma.hbm_to_vmem [thread:$0]  %s6, 1024, %s378, [#allocation10], 64, 64, 4
        $region36: #{tpu_custom_call.1} parent=11 // pred_fallthru
          _
        // Predicated region
        $region37: #{tpu_custom_call.1} parent=11 // pred_check
          %p384 = pneg %p201
        $region38: #{tpu_custom_call.1} parent=11 // pred_check_branch
          %386 = sbr.rel (%p384) target = $region40
        $region39: #{tpu_custom_call.1} parent=11 // pred_region
          _
        $region40: #{tpu_custom_call.1} parent=11 // pred_fallthru
          _
        // Predicated region
        $region41: #{tpu_custom_call.1} parent=11 // pred_check
          %p387 = pneg %p222
        $region42: #{tpu_custom_call.1} parent=11 // pred_check_branch
          %389 = sbr.rel (%p387) target = $region44
        $region43: #{tpu_custom_call.1} parent=11 // pred_region
          %s391 = ssub.s32 1024, 1024
          %392 = vsyncadd [#allocation13], %s391
          %s393 = sshll.u32 [#allocation12], 4
          %s394 = int_to_ptr.vmem [resolvable:$true] %s393
          %399 = dma.hbm_to_vmem [thread:$0]  %s8, 1024, %s394, [#allocation13], 64, 64, 4
        $region44: #{tpu_custom_call.1} parent=11 // pred_fallthru
          _
        // Predicated region
        $region45: #{tpu_custom_call.1} parent=11 // pred_check
          %p400 = pneg %p243
        $region46: #{tpu_custom_call.1} parent=11 // pred_check_branch
          %402 = sbr.rel (%p400) target = $region48
        $region47: #{tpu_custom_call.1} parent=11 // pred_region
          _
        $region48: #{tpu_custom_call.1} parent=11 // pred_fallthru
          _
        // Predicated region
        $region49: #{tpu_custom_call.1} parent=11 // pred_check
          %p403 = pneg %p264
        $region50: #{tpu_custom_call.1} parent=11 // pred_check_branch
          %405 = sbr.rel (%p403) target = $region52
        $region51: #{tpu_custom_call.1} parent=11 // pred_region
          %s407 = ssub.s32 1024, 1024
          %408 = vsyncadd [#allocation13], %s407
          %s409 = sshll.u32 [#allocation14], 4
          %s410 = int_to_ptr.vmem [resolvable:$true] %s409
          %415 = dma.hbm_to_vmem [thread:$0]  %s10, 1024, %s410, [#allocation13], 64, 64, 4
        $region52: #{tpu_custom_call.1} parent=11 // pred_fallthru
          _
        // Predicated region
        $region53: #{tpu_custom_call.1} parent=11 // pred_check
          %p416 = pneg %p285
        $region54: #{tpu_custom_call.1} parent=11 // pred_check_branch
          %418 = sbr.rel (%p416) target = $region56
        $region55: #{tpu_custom_call.1} parent=11 // pred_region
          _
        $region56: #{tpu_custom_call.1} parent=11 // pred_fallthru
          _
      $region12: #{tpu_custom_call.1} parent=5 // pred_fallthru
        _
      %p419 = scmp.lt.s32.totalorder %s28, 2
      // Predicated region
      $region57: #{tpu_custom_call.1} parent=5 // pred_check
        %p420 = pneg %p419
      $region58: #{tpu_custom_call.1} parent=5 // pred_check_branch
        %422 = sbr.rel (%p420) target = $region60
      $region59: #{tpu_custom_call.1} parent=5 // pred_region
        // Predicated region
        $region61: #{tpu_custom_call.1} parent=59 // pred_check
          %p423 = pneg %p69
        $region62: #{tpu_custom_call.1} parent=59 // pred_check_branch
          %425 = sbr.rel (%p423) target = $region64
        $region63: #{tpu_custom_call.1} parent=59 // pred_region
          %s426 = sand.u32 %s59, 1
          %s427 = scalar_lea.sflag [#allocation4], %s426
          %s428 = sand.u32 %s59, 1
          %s429 = smul.addr %s428, 256
          %s430 = scalar_lea.vmem [#allocation3], %s429
          %s431 = smul.u32 32, %s28
          %s433 = ssub.s32 4096, 4096
          %434 = vsyncadd %s427, %s433
          %s435 = smul.addr %s431, 128
          %s436 = scalar_lea.hbm %s1, %s435
          %s437 = sshll.u32 %s430, 4
          %s438 = int_to_ptr.vmem [resolvable:$true] %s437
          %443 = dma.hbm_to_vmem [thread:$0]  %s436, 4096, %s438, %s427, 128, 128, 8
        $region64: #{tpu_custom_call.1} parent=59 // pred_fallthru
          _
      $region60: #{tpu_custom_call.1} parent=5 // pred_fallthru
        _
      %p444 = scmp.le.s32.totalorder 1, %s28
      %p445 = scmp.lt.s32.totalorder %s28, 3
      %p446 = pnand %p444, %p445
      %p447 = pneg %p446
      // Predicated region
      $region65: #{tpu_custom_call.1} parent=5 // pred_check
        _
      $region66: #{tpu_custom_call.1} parent=5 // pred_check_branch
        %449 = sbr.rel (%p446) target = $region68
      $region67: #{tpu_custom_call.1} parent=5 // pred_region
        %s450 = ssub.s32 %s28, 1
        %s451 = sand.u32 %s62, 1
        %s452 = scalar_lea.sflag [#allocation4], %s451
        %s453 = sand.u32 %s62, 1
        %s454 = smul.addr %s453, 256
        %s455 = scalar_lea.vmem [#allocation3], %s454
        // Predicated region
        $region69: #{tpu_custom_call.1} parent=67 // pred_check
          %p456 = pneg %p75
        $region70: #{tpu_custom_call.1} parent=67 // pred_check_branch
          %458 = sbr.rel (%p456) target = $region72
        $region71: #{tpu_custom_call.1} parent=67 // pred_region
          %459 = dma.done %s452, 4096
        $region72: #{tpu_custom_call.1} parent=67 // pred_fallthru
          _
        // Predicated region
        $region73: #{tpu_custom_call.1} parent=67 // pred_check
          %p460 = pneg %p96
        $region74: #{tpu_custom_call.1} parent=67 // pred_check_branch
          %462 = sbr.rel (%p460) target = $region76
        $region75: #{tpu_custom_call.1} parent=67 // pred_region
          %463 = dma.done [#allocation7], 2048
        $region76: #{tpu_custom_call.1} parent=67 // pred_fallthru
          _
        // Predicated region
        $region77: #{tpu_custom_call.1} parent=67 // pred_check
          %p464 = pneg %p117
        $region78: #{tpu_custom_call.1} parent=67 // pred_check_branch
          %466 = sbr.rel (%p464) target = $region80
        $region79: #{tpu_custom_call.1} parent=67 // pred_region
          %467 = dma.done [#allocation7], 1024
        $region80: #{tpu_custom_call.1} parent=67 // pred_fallthru
          _
        // Predicated region
        $region81: #{tpu_custom_call.1} parent=67 // pred_check
          %p468 = pneg %p159
        $region82: #{tpu_custom_call.1} parent=67 // pred_check_branch
          %470 = sbr.rel (%p468) target = $region84
        $region83: #{tpu_custom_call.1} parent=67 // pred_region
          %471 = dma.done [#allocation10], 1024
        $region84: #{tpu_custom_call.1} parent=67 // pred_fallthru
          _
        // Predicated region
        $region85: #{tpu_custom_call.1} parent=67 // pred_check
          %p472 = pneg %p180
        $region86: #{tpu_custom_call.1} parent=67 // pred_check_branch
          %474 = sbr.rel (%p472) target = $region88
        $region87: #{tpu_custom_call.1} parent=67 // pred_region
          %475 = dma.done [#allocation10], 1024
        $region88: #{tpu_custom_call.1} parent=67 // pred_fallthru
          _
        // Predicated region
        $region89: #{tpu_custom_call.1} parent=67 // pred_check
          %p476 = pneg %p222
        $region90: #{tpu_custom_call.1} parent=67 // pred_check_branch
          %478 = sbr.rel (%p476) target = $region92
        $region91: #{tpu_custom_call.1} parent=67 // pred_region
          %479 = dma.done [#allocation13], 1024
        $region92: #{tpu_custom_call.1} parent=67 // pred_fallthru
          _
        // Predicated region
        $region93: #{tpu_custom_call.1} parent=67 // pred_check
          %p480 = pneg %p264
        $region94: #{tpu_custom_call.1} parent=67 // pred_check_branch
          %482 = sbr.rel (%p480) target = $region96
        $region95: #{tpu_custom_call.1} parent=67 // pred_region
          %483 = dma.done [#allocation13], 1024
        $region96: #{tpu_custom_call.1} parent=67 // pred_fallthru
          _
        %p484 = pneg %p49
        %p485 = pneg %p46
        %s486 = sand.u32 %s62, 1
        %s487 = scalar_lea.sflag [#allocation4], %s486
        %s488 = sand.u32 %s62, 1
        %s489 = smul.addr %s488, 256
        %s490 = scalar_lea.vmem [#allocation3], %s489
        %p491 = pneg %p75
        %p492 = pneg %p72
        %p493 = pneg %p96
        %p494 = pneg %p93
        %p495 = pneg %p117
        %p496 = pneg %p114
        %p497 = pneg %p138
        %p498 = pneg %p135
        %p499 = pneg %p159
        %p500 = pneg %p156
        %p501 = pneg %p180
        %p502 = pneg %p177
        %p503 = pneg %p201
        %p504 = pneg %p198
        %p505 = pneg %p222
        %p506 = pneg %p219
        %p507 = pneg %p243
        %p508 = pneg %p240
        %p509 = pneg %p264
        %p510 = pneg %p261
        %p511 = pneg %p285
        %p512 = pneg %p282
        %p513 = pneg %p311
        %p514 = pneg %p308
        %s515 = sand.u32 %s298, 1
        %s516 = scalar_lea.sflag [#allocation5], %s515
        %s517 = sand.u32 %s298, 1
        %s518 = smul.addr %s517, 128
        %s519 = scalar_lea.vmem [#allocation15], %s518
        %s520 = smul.u32 32, %s33
        %s521 = smul.u32 32, %s33
        %v523 = vld [vmem:[%s455] sm:$0xff]
        %v524 = vld [vmem:[%s455 + $0x8] sm:$0xff]
        %v525 = vld [vmem:[%s455 + $0x10] sm:$0xff]
        %v526 = vld [vmem:[%s455 + $0x18] sm:$0xff]
        %v527 = vld [vmem:[%s455 + $0x20] sm:$0xff]
        %v528 = vld [vmem:[%s455 + $0x28] sm:$0xff]
        %v529 = vld [vmem:[%s455 + $0x30] sm:$0xff]
        %v530 = vld [vmem:[%s455 + $0x38] sm:$0xff]
        %v531 = vld [vmem:[%s455 + $0x40] sm:$0xff]
        %v532 = vld [vmem:[%s455 + $0x48] sm:$0xff]
        %v533 = vld [vmem:[%s455 + $0x50] sm:$0xff]
        %v534 = vld [vmem:[%s455 + $0x58] sm:$0xff]
        %v535 = vld [vmem:[%s455 + $0x60] sm:$0xff]
        %v536 = vld [vmem:[%s455 + $0x68] sm:$0xff]
        %v537 = vld [vmem:[%s455 + $0x70] sm:$0xff]
        %v538 = vld [vmem:[%s455 + $0x78] sm:$0xff]
        %v539 = vld [vmem:[%s455 + $0x80] sm:$0xff]
        %v540 = vld [vmem:[%s455 + $0x88] sm:$0xff]
        %v541 = vld [vmem:[%s455 + $0x90] sm:$0xff]
        %v542 = vld [vmem:[%s455 + $0x98] sm:$0xff]
        %v543 = vld [vmem:[%s455 + $0xa0] sm:$0xff]
        %v544 = vld [vmem:[%s455 + $0xa8] sm:$0xff]
        %v545 = vld [vmem:[%s455 + $0xb0] sm:$0xff]
        %v546 = vld [vmem:[%s455 + $0xb8] sm:$0xff]
        %v547 = vld [vmem:[%s455 + $0xc0] sm:$0xff]
        %v548 = vld [vmem:[%s455 + $0xc8] sm:$0xff]
        %v549 = vld [vmem:[%s455 + $0xd0] sm:$0xff]
        %v550 = vld [vmem:[%s455 + $0xd8] sm:$0xff]
        %v551 = vld [vmem:[%s455 + $0xe0] sm:$0xff]
        %v552 = vld [vmem:[%s455 + $0xe8] sm:$0xff]
        %v553 = vld [vmem:[%s455 + $0xf0] sm:$0xff]
        %v554 = vld [vmem:[%s455 + $0xf8] sm:$0xff]
        %v555 = vpack.c.bf16 %v524, %v523
        %v556 = vpack.c.bf16 %v526, %v525
        %v557 = vpack.c.bf16 %v528, %v527
        %v558 = vpack.c.bf16 %v530, %v529
        %v559 = vpack.c.bf16 %v532, %v531
        %v560 = vpack.c.bf16 %v534, %v533
        %v561 = vpack.c.bf16 %v536, %v535
        %v562 = vpack.c.bf16 %v538, %v537
        %v563 = vpack.c.bf16 %v540, %v539
        %v564 = vpack.c.bf16 %v542, %v541
        %v565 = vpack.c.bf16 %v544, %v543
        %v566 = vpack.c.bf16 %v546, %v545
        %v567 = vpack.c.bf16 %v548, %v547
        %v568 = vpack.c.bf16 %v550, %v549
        %v569 = vpack.c.bf16 %v552, %v551
        %v570 = vpack.c.bf16 %v554, %v553
        %v571 = vld [vmem:[#allocation6] sm:$0xf]
        %v572 = vld [vmem:[#allocation6 + $0x4] sm:$0xf]
        %v573 = vld [vmem:[#allocation6 + $0x8] sm:$0xf]
        %v574 = vld [vmem:[#allocation6 + $0xc] sm:$0xf]
        %v575 = vld [vmem:[#allocation6 + $0x10] sm:$0xf]
        %v576 = vld [vmem:[#allocation6 + $0x14] sm:$0xf]
        %v577 = vld [vmem:[#allocation6 + $0x18] sm:$0xf]
        %v578 = vld [vmem:[#allocation6 + $0x1c] sm:$0xf]
        %v579 = vld [vmem:[#allocation6 + $0x20] sm:$0xf]
        %v580 = vld [vmem:[#allocation6 + $0x24] sm:$0xf]
        %v581 = vld [vmem:[#allocation6 + $0x28] sm:$0xf]
        %v582 = vld [vmem:[#allocation6 + $0x2c] sm:$0xf]
        %v583 = vld [vmem:[#allocation6 + $0x30] sm:$0xf]
        %v584 = vld [vmem:[#allocation6 + $0x34] sm:$0xf]
        %v585 = vld [vmem:[#allocation6 + $0x38] sm:$0xf]
        %v586 = vld [vmem:[#allocation6 + $0x3c] sm:$0xf]
        %v587 = vld [vmem:[#allocation6 + $0x40] sm:$0xf]
        %v588 = vld [vmem:[#allocation6 + $0x44] sm:$0xf]
        %v589 = vld [vmem:[#allocation6 + $0x48] sm:$0xf]
        %v590 = vld [vmem:[#allocation6 + $0x4c] sm:$0xf]
        %v591 = vld [vmem:[#allocation6 + $0x50] sm:$0xf]
        %v592 = vld [vmem:[#allocation6 + $0x54] sm:$0xf]
        %v593 = vld [vmem:[#allocation6 + $0x58] sm:$0xf]
        %v594 = vld [vmem:[#allocation6 + $0x5c] sm:$0xf]
        %v595 = vld [vmem:[#allocation6 + $0x60] sm:$0xf]
        %v596 = vld [vmem:[#allocation6 + $0x64] sm:$0xf]
        %v597 = vld [vmem:[#allocation6 + $0x68] sm:$0xf]
        %v598 = vld [vmem:[#allocation6 + $0x6c] sm:$0xf]
        %v599 = vld [vmem:[#allocation6 + $0x70] sm:$0xf]
        %v600 = vld [vmem:[#allocation6 + $0x74] sm:$0xf]
        %v601 = vld [vmem:[#allocation6 + $0x78] sm:$0xf]
        %v602 = vld [vmem:[#allocation6 + $0x7c] sm:$0xf]
        %v603 = vld [vmem:[#allocation8] sm:$0xf]
        %v604 = vld [vmem:[#allocation8 + $0x4] sm:$0xf]
        %v605 = vld [vmem:[#allocation8 + $0x8] sm:$0xf]
        %v606 = vld [vmem:[#allocation8 + $0xc] sm:$0xf]
        %v607 = vld [vmem:[#allocation8 + $0x10] sm:$0xf]
        %v608 = vld [vmem:[#allocation8 + $0x14] sm:$0xf]
        %v609 = vld [vmem:[#allocation8 + $0x18] sm:$0xf]
        %v610 = vld [vmem:[#allocation8 + $0x1c] sm:$0xf]
        %v611 = vld [vmem:[#allocation8 + $0x20] sm:$0xf]
        %v612 = vld [vmem:[#allocation8 + $0x24] sm:$0xf]
        %v613 = vld [vmem:[#allocation8 + $0x28] sm:$0xf]
        %v614 = vld [vmem:[#allocation8 + $0x2c] sm:$0xf]
        %v615 = vld [vmem:[#allocation8 + $0x30] sm:$0xf]
        %v616 = vld [vmem:[#allocation8 + $0x34] sm:$0xf]
        %v617 = vld [vmem:[#allocation8 + $0x38] sm:$0xf]
        %v618 = vld [vmem:[#allocation8 + $0x3c] sm:$0xf]
        %v619 = vld [vmem:[%s4] sm:$0x1]
        %v621 = vlaneseq
        %v622 = vshrl.u32 %v621, 7
        %v623 = vsub.s32 0, %v622
        %v624 = vrot.slane %v619, %v623
        %v642 = vunpack.c.l.b16 %v603
        %v643 = vunpack.c.l.b16 %v604
        %v644 = vunpack.c.l.b16 %v605
        %v645 = vunpack.c.l.b16 %v606
        %v646 = vunpack.c.l.b16 %v607
        %v647 = vunpack.c.l.b16 %v608
        %v648 = vunpack.c.l.b16 %v609
        %v649 = vunpack.c.l.b16 %v610
        %v650 = vunpack.c.l.b16 %v611
        %v651 = vunpack.c.l.b16 %v612
        %v652 = vunpack.c.l.b16 %v613
        %v653 = vunpack.c.l.b16 %v614
        %v654 = vunpack.c.l.b16 %v615
        %v655 = vunpack.c.l.b16 %v616
        %v656 = vunpack.c.l.b16 %v617
        %v657 = vunpack.c.l.b16 %v618
        %v658 = vpack.c.b16 %v643, %v642
        %v659 = vpack.c.b16 %v645, %v644
        %v660 = vpack.c.b16 %v647, %v646
        %v661 = vpack.c.b16 %v649, %v648
        %v662 = vpack.c.b16 %v651, %v650
        %v663 = vpack.c.b16 %v653, %v652
        %v664 = vpack.c.b16 %v655, %v654
        %v665 = vpack.c.b16 %v657, %v656
        %674 = vmatprep.subr.bf16.mxu0 0
        %675 = vmatpush1.bf16.msra.mxu0 %v658
        %676 = vmatprep.subr.bf16.mxu0 0
        %677 = vmatpush1.bf16.msra.mxu0 %v659
        %678 = vmatprep.subr.bf16.mxu0 0
        %679 = vmatpush1.bf16.msra.mxu0 %v660
        %680 = vmatprep.subr.bf16.mxu0 0
        %681 = vmatpush1.bf16.msra.mxu0 %v661
        %682 = vmatprep.subr.bf16.mxu0 0
        %683 = vmatpush1.bf16.msra.mxu0 %v662
        %684 = vmatprep.subr.bf16.mxu0 0
        %685 = vmatpush1.bf16.msra.mxu0 %v663
        %686 = vmatprep.subr.bf16.mxu0 0
        %687 = vmatpush1.bf16.msra.mxu0 %v664
        %688 = vmatprep.subr.bf16.mxu0 0
        %689 = vmatpush1.bf16.msra.mxu0 %v665
        %690 = vmatprep.subr.bf16.mxu0 0
        %691 = vmatpush1.bf16.msra.mxu0 0
        %692 = vmatprep.subr.bf16.mxu0 0
        %693 = vmatpush1.bf16.msra.mxu0 0
        %694 = vmatprep.subr.bf16.mxu0 0
        %695 = vmatpush1.bf16.msra.mxu0 0
        %696 = vmatprep.subr.bf16.mxu0 0
        %697 = vmatpush1.bf16.msra.mxu0 0
        %698 = vmatprep.subr.bf16.mxu0 0
        %699 = vmatpush1.bf16.msra.mxu0 0
        %700 = vmatprep.subr.bf16.mxu0 0
        %701 = vmatpush1.bf16.msra.mxu0 0
        %702 = vmatprep.subr.bf16.mxu0 0
        %703 = vmatpush1.bf16.msra.mxu0 0
        %704 = vmatprep.subr.bf16.mxu0 0
        %705 = vmatpush1.bf16.msra.mxu0 0
        %706 = vmatprep.mubr.bf16.mxu0 0
        %707 = vmatmul.mubr.bf16.gmra.mrb[0].mxu0 %v555
        %v708 = vpop.f32.mrb[0].mxu0
        %v709 = vadd.f32 %v624, %v708
        %v710 = vpop.f32.mrb[0].mxu0
        %v711 = vpop.f32.mrb[0].mxu0
        %v712 = vadd.f32 %v624, %v711
        %v713 = vpop.f32.mrb[0].mxu0
        %714 = vmatprep.mubr.bf16.mxu0 0
        %715 = vmatmul.mubr.bf16.gmra.mrb[0].mxu0 %v556
        %v716 = vpop.f32.mrb[0].mxu0
        %v717 = vadd.f32 %v624, %v716
        %v718 = vpop.f32.mrb[0].mxu0
        %v719 = vpop.f32.mrb[0].mxu0
        %v720 = vadd.f32 %v624, %v719
        %v721 = vpop.f32.mrb[0].mxu0
        %722 = vmatprep.mubr.bf16.mxu0 0
        %723 = vmatmul.mubr.bf16.gmra.mrb[0].mxu0 %v557
        %v724 = vpop.f32.mrb[0].mxu0
        %v725 = vadd.f32 %v624, %v724
        %v726 = vpop.f32.mrb[0].mxu0
        %v727 = vpop.f32.mrb[0].mxu0
        %v728 = vadd.f32 %v624, %v727
        %v729 = vpop.f32.mrb[0].mxu0
        %730 = vmatprep.mubr.bf16.mxu0 0
        %731 = vmatmul.mubr.bf16.gmra.mrb[0].mxu0 %v558
        %v732 = vpop.f32.mrb[0].mxu0
        %v733 = vadd.f32 %v624, %v732
        %v734 = vpop.f32.mrb[0].mxu0
        %v735 = vpop.f32.mrb[0].mxu0
        %v736 = vadd.f32 %v624, %v735
        %v737 = vpop.f32.mrb[0].mxu0
        %738 = vmatprep.mubr.bf16.mxu0 0
        %739 = vmatmul.mubr.bf16.gmra.mrb[0].mxu0 %v559
        %v740 = vpop.f32.mrb[0].mxu0
        %v741 = vadd.f32 %v624, %v740
        %v742 = vpop.f32.mrb[0].mxu0
        %v743 = vpop.f32.mrb[0].mxu0
        %v744 = vadd.f32 %v624, %v743
        %v745 = vpop.f32.mrb[0].mxu0
        %746 = vmatprep.mubr.bf16.mxu0 0
        %747 = vmatmul.mubr.bf16.gmra.mrb[0].mxu0 %v560
        %v748 = vpop.f32.mrb[0].mxu0
        %v749 = vadd.f32 %v624, %v748
        %v750 = vpop.f32.mrb[0].mxu0
        %v751 = vpop.f32.mrb[0].mxu0
        %v752 = vadd.f32 %v624, %v751
        %v753 = vpop.f32.mrb[0].mxu0
        %754 = vmatprep.mubr.bf16.mxu0 0
        %755 = vmatmul.mubr.bf16.gmra.mrb[0].mxu0 %v561
        %v756 = vpop.f32.mrb[0].mxu0
        %v757 = vadd.f32 %v624, %v756
        %v758 = vpop.f32.mrb[0].mxu0
        %v759 = vpop.f32.mrb[0].mxu0
        %v760 = vadd.f32 %v624, %v759
        %v761 = vpop.f32.mrb[0].mxu0
        %762 = vmatprep.mubr.bf16.mxu0 0
        %763 = vmatmul.mubr.bf16.gmra.mrb[0].mxu0 %v562
        %v764 = vpop.f32.mrb[0].mxu0
        %v765 = vadd.f32 %v624, %v764
        %v766 = vpop.f32.mrb[0].mxu0
        %v767 = vpop.f32.mrb[0].mxu0
        %v768 = vadd.f32 %v624, %v767
        %v769 = vpop.f32.mrb[0].mxu0
        %770 = vmatprep.mubr.bf16.mxu0 0
        %771 = vmatmul.mubr.bf16.gmra.mrb[0].mxu0 %v563
        %v772 = vpop.f32.mrb[0].mxu0
        %v773 = vadd.f32 %v624, %v772
        %v774 = vpop.f32.mrb[0].mxu0
        %v775 = vpop.f32.mrb[0].mxu0
        %v776 = vadd.f32 %v624, %v775
        %v777 = vpop.f32.mrb[0].mxu0
        %778 = vmatprep.mubr.bf16.mxu0 0
        %779 = vmatmul.mubr.bf16.gmra.mrb[0].mxu0 %v564
        %v780 = vpop.f32.mrb[0].mxu0
        %v781 = vadd.f32 %v624, %v780
        %v782 = vpop.f32.mrb[0].mxu0
        %v783 = vpop.f32.mrb[0].mxu0
        %v784 = vadd.f32 %v624, %v783
        %v785 = vpop.f32.mrb[0].mxu0
        %786 = vmatprep.mubr.bf16.mxu0 0
        %787 = vmatmul.mubr.bf16.gmra.mrb[0].mxu0 %v565
        %v788 = vpop.f32.mrb[0].mxu0
        %v789 = vadd.f32 %v624, %v788
        %v790 = vpop.f32.mrb[0].mxu0
        %v791 = vpop.f32.mrb[0].mxu0
        %v792 = vadd.f32 %v624, %v791
        %v793 = vpop.f32.mrb[0].mxu0
        %794 = vmatprep.mubr.bf16.mxu0 0
        %795 = vmatmul.mubr.bf16.gmra.mrb[0].mxu0 %v566
        %v796 = vpop.f32.mrb[0].mxu0
        %v797 = vadd.f32 %v624, %v796
        %v798 = vpop.f32.mrb[0].mxu0
        %v799 = vpop.f32.mrb[0].mxu0
        %v800 = vadd.f32 %v624, %v799
        %v801 = vpop.f32.mrb[0].mxu0
        %802 = vmatprep.mubr.bf16.mxu0 0
        %803 = vmatmul.mubr.bf16.gmra.mrb[0].mxu0 %v567
        %v804 = vpop.f32.mrb[0].mxu0
        %v805 = vadd.f32 %v624, %v804
        %v806 = vpop.f32.mrb[0].mxu0
        %v807 = vpop.f32.mrb[0].mxu0
        %v808 = vadd.f32 %v624, %v807
        %v809 = vpop.f32.mrb[0].mxu0
        %810 = vmatprep.mubr.bf16.mxu0 0
        %811 = vmatmul.mubr.bf16.gmra.mrb[0].mxu0 %v568
        %v812 = vpop.f32.mrb[0].mxu0
        %v813 = vadd.f32 %v624, %v812
        %v814 = vpop.f32.mrb[0].mxu0
        %v815 = vpop.f32.mrb[0].mxu0
        %v816 = vadd.f32 %v624, %v815
        %v817 = vpop.f32.mrb[0].mxu0
        %818 = vmatprep.mubr.bf16.mxu0 0
        %819 = vmatmul.mubr.bf16.gmra.mrb[0].mxu0 %v569
        %v820 = vpop.f32.mrb[0].mxu0
        %v821 = vadd.f32 %v624, %v820
        %v822 = vpop.f32.mrb[0].mxu0
        %v823 = vpop.f32.mrb[0].mxu0
        %v824 = vadd.f32 %v624, %v823
        %v825 = vpop.f32.mrb[0].mxu0
        %826 = vmatprep.mubr.bf16.mxu0 0
        %827 = vmatmul.mubr.bf16.gmra.mrb[0].mxu0 %v570
        %v828 = vpop.f32.mrb[0].mxu0
        %v829 = vadd.f32 %v624, %v828
        %v830 = vpop.f32.mrb[0].mxu0
        %v831 = vpop.f32.mrb[0].mxu0
        %v832 = vadd.f32 %v624, %v831
        %v833 = vpop.f32.mrb[0].mxu0
        %834 = vdwg.mxu0
        %v835 = vmax.f32 %v709, 0.0
        %v836 = vmax.f32 %v712, 0.0
        %v837 = vmax.f32 %v717, 0.0
        %v838 = vmax.f32 %v720, 0.0
        %v839 = vmax.f32 %v725, 0.0
        %v840 = vmax.f32 %v728, 0.0
        %v841 = vmax.f32 %v733, 0.0
        %v842 = vmax.f32 %v736, 0.0
        %v843 = vmax.f32 %v741, 0.0
        %v844 = vmax.f32 %v744, 0.0
        %v845 = vmax.f32 %v749, 0.0
        %v846 = vmax.f32 %v752, 0.0
        %v847 = vmax.f32 %v757, 0.0
        %v848 = vmax.f32 %v760, 0.0
        %v849 = vmax.f32 %v765, 0.0
        %v850 = vmax.f32 %v768, 0.0
        %v851 = vmax.f32 %v773, 0.0
        %v852 = vmax.f32 %v776, 0.0
        %v853 = vmax.f32 %v781, 0.0
        %v854 = vmax.f32 %v784, 0.0
        %v855 = vmax.f32 %v789, 0.0
        %v856 = vmax.f32 %v792, 0.0
        %v857 = vmax.f32 %v797, 0.0
        %v858 = vmax.f32 %v800, 0.0
        %v859 = vmax.f32 %v805, 0.0
        %v860 = vmax.f32 %v808, 0.0
        %v861 = vmax.f32 %v813, 0.0
        %v862 = vmax.f32 %v816, 0.0
        %v863 = vmax.f32 %v821, 0.0
        %v864 = vmax.f32 %v824, 0.0
        %v865 = vmax.f32 %v829, 0.0
        %v866 = vmax.f32 %v832, 0.0
        %v867 = vld [vmem:[#allocation9] sm:$0xf]
        %v868 = vld [vmem:[#allocation9 + $0x4] sm:$0xf]
        %v869 = vld [vmem:[#allocation9 + $0x8] sm:$0xf]
        %v870 = vld [vmem:[#allocation9 + $0xc] sm:$0xf]
        %v871 = vld [vmem:[#allocation9 + $0x10] sm:$0xf]
        %v872 = vld [vmem:[#allocation9 + $0x14] sm:$0xf]
        %v873 = vld [vmem:[#allocation9 + $0x18] sm:$0xf]
        %v874 = vld [vmem:[#allocation9 + $0x1c] sm:$0xf]
        %v875 = vld [vmem:[#allocation9 + $0x20] sm:$0xf]
        %v876 = vld [vmem:[#allocation9 + $0x24] sm:$0xf]
        %v877 = vld [vmem:[#allocation9 + $0x28] sm:$0xf]
        %v878 = vld [vmem:[#allocation9 + $0x2c] sm:$0xf]
        %v879 = vld [vmem:[#allocation9 + $0x30] sm:$0xf]
        %v880 = vld [vmem:[#allocation9 + $0x34] sm:$0xf]
        %v881 = vld [vmem:[#allocation9 + $0x38] sm:$0xf]
        %v882 = vld [vmem:[#allocation9 + $0x3c] sm:$0xf]
        %v883 = vpack.c.bf16 %v836, %v835
        %v884 = vpack.c.bf16 %v838, %v837
        %v885 = vpack.c.bf16 %v840, %v839
        %v886 = vpack.c.bf16 %v842, %v841
        %v887 = vpack.c.bf16 %v844, %v843
        %v888 = vpack.c.bf16 %v846, %v845
        %v889 = vpack.c.bf16 %v848, %v847
        %v890 = vpack.c.bf16 %v850, %v849
        %v891 = vpack.c.bf16 %v852, %v851
        %v892 = vpack.c.bf16 %v854, %v853
        %v893 = vpack.c.bf16 %v856, %v855
        %v894 = vpack.c.bf16 %v858, %v857
        %v895 = vpack.c.bf16 %v860, %v859
        %v896 = vpack.c.bf16 %v862, %v861
        %v897 = vpack.c.bf16 %v864, %v863
        %v898 = vpack.c.bf16 %v866, %v865
        %v899 = vld [vmem:[#allocation11] sm:$0xf]
        %v900 = vld [vmem:[#allocation11 + $0x4] sm:$0xf]
        %v901 = vld [vmem:[#allocation11 + $0x8] sm:$0xf]
        %v902 = vld [vmem:[#allocation11 + $0xc] sm:$0xf]
        %v903 = vld [vmem:[#allocation11 + $0x10] sm:$0xf]
        %v904 = vld [vmem:[#allocation11 + $0x14] sm:$0xf]
        %v905 = vld [vmem:[#allocation11 + $0x18] sm:$0xf]
        %v906 = vld [vmem:[#allocation11 + $0x1c] sm:$0xf]
        %v907 = vld [vmem:[#allocation11 + $0x20] sm:$0xf]
        %v908 = vld [vmem:[#allocation11 + $0x24] sm:$0xf]
        %v909 = vld [vmem:[#allocation11 + $0x28] sm:$0xf]
        %v910 = vld [vmem:[#allocation11 + $0x2c] sm:$0xf]
        %v911 = vld [vmem:[#allocation11 + $0x30] sm:$0xf]
        %v912 = vld [vmem:[#allocation11 + $0x34] sm:$0xf]
        %v913 = vld [vmem:[#allocation11 + $0x38] sm:$0xf]
        %v914 = vld [vmem:[#allocation11 + $0x3c] sm:$0xf]
        %v931 = vunpack.c.l.b16 %v899
        %v932 = vunpack.c.l.b16 %v900
        %v933 = vunpack.c.l.b16 %v901
        %v934 = vunpack.c.l.b16 %v902
        %v935 = vunpack.c.l.b16 %v903
        %v936 = vunpack.c.l.b16 %v904
        %v937 = vunpack.c.l.b16 %v905
        %v938 = vunpack.c.l.b16 %v906
        %v939 = vunpack.c.l.b16 %v907
        %v940 = vunpack.c.l.b16 %v908
        %v941 = vunpack.c.l.b16 %v909
        %v942 = vunpack.c.l.b16 %v910
        %v943 = vunpack.c.l.b16 %v911
        %v944 = vunpack.c.l.b16 %v912
        %v945 = vunpack.c.l.b16 %v913
        %v946 = vunpack.c.l.b16 %v914
        %v947 = vpack.c.b16 %v932, %v931
        %v948 = vpack.c.b16 %v934, %v933
        %v949 = vpack.c.b16 %v936, %v935
        %v950 = vpack.c.b16 %v938, %v937
        %v951 = vpack.c.b16 %v940, %v939
        %v952 = vpack.c.b16 %v942, %v941
        %v953 = vpack.c.b16 %v944, %v943
        %v954 = vpack.c.b16 %v946, %v945
        %963 = vmatprep.subr.bf16.mxu0 0
        %964 = vmatpush1.bf16.msra.mxu0 %v947
        %965 = vmatprep.subr.bf16.mxu0 0
        %966 = vmatpush1.bf16.msra.mxu0 %v948
        %967 = vmatprep.subr.bf16.mxu0 0
        %968 = vmatpush1.bf16.msra.mxu0 %v949
        %969 = vmatprep.subr.bf16.mxu0 0
        %970 = vmatpush1.bf16.msra.mxu0 %v950
        %971 = vmatprep.subr.bf16.mxu0 0
        %972 = vmatpush1.bf16.msra.mxu0 %v951
        %973 = vmatprep.subr.bf16.mxu0 0
        %974 = vmatpush1.bf16.msra.mxu0 %v952
        %975 = vmatprep.subr.bf16.mxu0 0
        %976 = vmatpush1.bf16.msra.mxu0 %v953
        %977 = vmatprep.subr.bf16.mxu0 0
        %978 = vmatpush1.bf16.msra.mxu0 %v954
        %979 = vmatprep.subr.bf16.mxu0 0
        %980 = vmatpush1.bf16.msra.mxu0 0
        %981 = vmatprep.subr.bf16.mxu0 0
        %982 = vmatpush1.bf16.msra.mxu0 0
        %983 = vmatprep.subr.bf16.mxu0 0
        %984 = vmatpush1.bf16.msra.mxu0 0
        %985 = vmatprep.subr.bf16.mxu0 0
        %986 = vmatpush1.bf16.msra.mxu0 0
        %987 = vmatprep.subr.bf16.mxu0 0
        %988 = vmatpush1.bf16.msra.mxu0 0
        %989 = vmatprep.subr.bf16.mxu0 0
        %990 = vmatpush1.bf16.msra.mxu0 0
        %991 = vmatprep.subr.bf16.mxu0 0
        %992 = vmatpush1.bf16.msra.mxu0 0
        %993 = vmatprep.subr.bf16.mxu0 0
        %994 = vmatpush1.bf16.msra.mxu0 0
        %995 = vmatprep.mubr.bf16.mxu0 0
        %996 = vmatmul.mubr.bf16.gmra.mrb[0].mxu0 %v883
        %v997 = vpop.f32.mrb[0].mxu0
        %v998 = vadd.f32 0.0, %v997
        %v999 = vpop.f32.mrb[0].mxu0
        %v1000 = vpop.f32.mrb[0].mxu0
        %v1001 = vadd.f32 0.0, %v1000
        %v1002 = vpop.f32.mrb[0].mxu0
        %1003 = vmatprep.mubr.bf16.mxu0 0
        %1004 = vmatmul.mubr.bf16.gmra.mrb[0].mxu0 %v884
        %v1005 = vpop.f32.mrb[0].mxu0
        %v1006 = vadd.f32 0.0, %v1005
        %v1007 = vpop.f32.mrb[0].mxu0
        %v1008 = vpop.f32.mrb[0].mxu0
        %v1009 = vadd.f32 0.0, %v1008
        %v1010 = vpop.f32.mrb[0].mxu0
        %1011 = vmatprep.mubr.bf16.mxu0 0
        %1012 = vmatmul.mubr.bf16.gmra.mrb[0].mxu0 %v885
        %v1013 = vpop.f32.mrb[0].mxu0
        %v1014 = vadd.f32 0.0, %v1013
        %v1015 = vpop.f32.mrb[0].mxu0
        %v1016 = vpop.f32.mrb[0].mxu0
        %v1017 = vadd.f32 0.0, %v1016
        %v1018 = vpop.f32.mrb[0].mxu0
        %1019 = vmatprep.mubr.bf16.mxu0 0
        %1020 = vmatmul.mubr.bf16.gmra.mrb[0].mxu0 %v886
        %v1021 = vpop.f32.mrb[0].mxu0
        %v1022 = vadd.f32 0.0, %v1021
        %v1023 = vpop.f32.mrb[0].mxu0
        %v1024 = vpop.f32.mrb[0].mxu0
        %v1025 = vadd.f32 0.0, %v1024
        %v1026 = vpop.f32.mrb[0].mxu0
        %1027 = vmatprep.mubr.bf16.mxu0 0
        %1028 = vmatmul.mubr.bf16.gmra.mrb[0].mxu0 %v887
        %v1029 = vpop.f32.mrb[0].mxu0
        %v1030 = vadd.f32 0.0, %v1029
        %v1031 = vpop.f32.mrb[0].mxu0
        %v1032 = vpop.f32.mrb[0].mxu0
        %v1033 = vadd.f32 0.0, %v1032
        %v1034 = vpop.f32.mrb[0].mxu0
        %1035 = vmatprep.mubr.bf16.mxu0 0
        %1036 = vmatmul.mubr.bf16.gmra.mrb[0].mxu0 %v888
        %v1037 = vpop.f32.mrb[0].mxu0
        %v1038 = vadd.f32 0.0, %v1037
        %v1039 = vpop.f32.mrb[0].mxu0
        %v1040 = vpop.f32.mrb[0].mxu0
        %v1041 = vadd.f32 0.0, %v1040
        %v1042 = vpop.f32.mrb[0].mxu0
        %1043 = vmatprep.mubr.bf16.mxu0 0
        %1044 = vmatmul.mubr.bf16.gmra.mrb[0].mxu0 %v889
        %v1045 = vpop.f32.mrb[0].mxu0
        %v1046 = vadd.f32 0.0, %v1045
        %v1047 = vpop.f32.mrb[0].mxu0
        %v1048 = vpop.f32.mrb[0].mxu0
        %v1049 = vadd.f32 0.0, %v1048
        %v1050 = vpop.f32.mrb[0].mxu0
        %1051 = vmatprep.mubr.bf16.mxu0 0
        %1052 = vmatmul.mubr.bf16.gmra.mrb[0].mxu0 %v890
        %v1053 = vpop.f32.mrb[0].mxu0
        %v1054 = vadd.f32 0.0, %v1053
        %v1055 = vpop.f32.mrb[0].mxu0
        %v1056 = vpop.f32.mrb[0].mxu0
        %v1057 = vadd.f32 0.0, %v1056
        %v1058 = vpop.f32.mrb[0].mxu0
        %1059 = vmatprep.mubr.bf16.mxu0 0
        %1060 = vmatmul.mubr.bf16.gmra.mrb[0].mxu0 %v891
        %v1061 = vpop.f32.mrb[0].mxu0
        %v1062 = vadd.f32 0.0, %v1061
        %v1063 = vpop.f32.mrb[0].mxu0
        %v1064 = vpop.f32.mrb[0].mxu0
        %v1065 = vadd.f32 0.0, %v1064
        %v1066 = vpop.f32.mrb[0].mxu0
        %1067 = vmatprep.mubr.bf16.mxu0 0
        %1068 = vmatmul.mubr.bf16.gmra.mrb[0].mxu0 %v892
        %v1069 = vpop.f32.mrb[0].mxu0
        %v1070 = vadd.f32 0.0, %v1069
        %v1071 = vpop.f32.mrb[0].mxu0
        %v1072 = vpop.f32.mrb[0].mxu0
        %v1073 = vadd.f32 0.0, %v1072
        %v1074 = vpop.f32.mrb[0].mxu0
        %1075 = vmatprep.mubr.bf16.mxu0 0
        %1076 = vmatmul.mubr.bf16.gmra.mrb[0].mxu0 %v893
        %v1077 = vpop.f32.mrb[0].mxu0
        %v1078 = vadd.f32 0.0, %v1077
        %v1079 = vpop.f32.mrb[0].mxu0
        %v1080 = vpop.f32.mrb[0].mxu0
        %v1081 = vadd.f32 0.0, %v1080
        %v1082 = vpop.f32.mrb[0].mxu0
        %1083 = vmatprep.mubr.bf16.mxu0 0
        %1084 = vmatmul.mubr.bf16.gmra.mrb[0].mxu0 %v894
        %v1085 = vpop.f32.mrb[0].mxu0
        %v1086 = vadd.f32 0.0, %v1085
        %v1087 = vpop.f32.mrb[0].mxu0
        %v1088 = vpop.f32.mrb[0].mxu0
        %v1089 = vadd.f32 0.0, %v1088
        %v1090 = vpop.f32.mrb[0].mxu0
        %1091 = vmatprep.mubr.bf16.mxu0 0
        %1092 = vmatmul.mubr.bf16.gmra.mrb[0].mxu0 %v895
        %v1093 = vpop.f32.mrb[0].mxu0
        %v1094 = vadd.f32 0.0, %v1093
        %v1095 = vpop.f32.mrb[0].mxu0
        %v1096 = vpop.f32.mrb[0].mxu0
        %v1097 = vadd.f32 0.0, %v1096
        %v1098 = vpop.f32.mrb[0].mxu0
        %1099 = vmatprep.mubr.bf16.mxu0 0
        %1100 = vmatmul.mubr.bf16.gmra.mrb[0].mxu0 %v896
        %v1101 = vpop.f32.mrb[0].mxu0
        %v1102 = vadd.f32 0.0, %v1101
        %v1103 = vpop.f32.mrb[0].mxu0
        %v1104 = vpop.f32.mrb[0].mxu0
        %v1105 = vadd.f32 0.0, %v1104
        %v1106 = vpop.f32.mrb[0].mxu0
        %1107 = vmatprep.mubr.bf16.mxu0 0
        %1108 = vmatmul.mubr.bf16.gmra.mrb[0].mxu0 %v897
        %v1109 = vpop.f32.mrb[0].mxu0
        %v1110 = vadd.f32 0.0, %v1109
        %v1111 = vpop.f32.mrb[0].mxu0
        %v1112 = vpop.f32.mrb[0].mxu0
        %v1113 = vadd.f32 0.0, %v1112
        %v1114 = vpop.f32.mrb[0].mxu0
        %1115 = vmatprep.mubr.bf16.mxu0 0
        %1116 = vmatmul.mubr.bf16.gmra.mrb[0].mxu0 %v898
        %v1117 = vpop.f32.mrb[0].mxu0
        %v1118 = vadd.f32 0.0, %v1117
        %v1119 = vpop.f32.mrb[0].mxu0
        %v1120 = vpop.f32.mrb[0].mxu0
        %v1121 = vadd.f32 0.0, %v1120
        %v1122 = vpop.f32.mrb[0].mxu0
        %1123 = vdwg.mxu0
        %v1156 = vunpack.c.l.b16 %v571
        %v1157 = vunpack.c.l.b16 %v572
        %v1158 = vunpack.c.l.b16 %v573
        %v1159 = vunpack.c.l.b16 %v574
        %v1160 = vunpack.c.l.b16 %v575
        %v1161 = vunpack.c.l.b16 %v576
        %v1162 = vunpack.c.l.b16 %v577
        %v1163 = vunpack.c.l.b16 %v578
        %v1164 = vunpack.c.l.b16 %v579
        %v1165 = vunpack.c.l.b16 %v580
        %v1166 = vunpack.c.l.b16 %v581
        %v1167 = vunpack.c.l.b16 %v582
        %v1168 = vunpack.c.l.b16 %v583
        %v1169 = vunpack.c.l.b16 %v584
        %v1170 = vunpack.c.l.b16 %v585
        %v1171 = vunpack.c.l.b16 %v586
        %v1172 = vunpack.c.l.b16 %v587
        %v1173 = vunpack.c.l.b16 %v588
        %v1174 = vunpack.c.l.b16 %v589
        %v1175 = vunpack.c.l.b16 %v590
        %v1176 = vunpack.c.l.b16 %v591
        %v1177 = vunpack.c.l.b16 %v592
        %v1178 = vunpack.c.l.b16 %v593
        %v1179 = vunpack.c.l.b16 %v594
        %v1180 = vunpack.c.l.b16 %v595
        %v1181 = vunpack.c.l.b16 %v596
        %v1182 = vunpack.c.l.b16 %v597
        %v1183 = vunpack.c.l.b16 %v598
        %v1184 = vunpack.c.l.b16 %v599
        %v1185 = vunpack.c.l.b16 %v600
        %v1186 = vunpack.c.l.b16 %v601
        %v1187 = vunpack.c.l.b16 %v602
        %v1188 = vpack.c.b16 %v1157, %v1156
        %v1189 = vpack.c.b16 %v1159, %v1158
        %v1190 = vpack.c.b16 %v1161, %v1160
        %v1191 = vpack.c.b16 %v1163, %v1162
        %v1192 = vpack.c.b16 %v1165, %v1164
        %v1193 = vpack.c.b16 %v1167, %v1166
        %v1194 = vpack.c.b16 %v1169, %v1168
        %v1195 = vpack.c.b16 %v1171, %v1170
        %v1196 = vpack.c.b16 %v1173, %v1172
        %v1197 = vpack.c.b16 %v1175, %v1174
        %v1198 = vpack.c.b16 %v1177, %v1176
        %v1199 = vpack.c.b16 %v1179, %v1178
        %v1200 = vpack.c.b16 %v1181, %v1180
        %v1201 = vpack.c.b16 %v1183, %v1182
        %v1202 = vpack.c.b16 %v1185, %v1184
        %v1203 = vpack.c.b16 %v1187, %v1186
        %v1236 = vunpack.c.l.b16 %v867
        %v1237 = vunpack.c.l.b16 %v868
        %v1238 = vunpack.c.l.b16 %v869
        %v1239 = vunpack.c.l.b16 %v870
        %v1240 = vunpack.c.l.b16 %v871
        %v1241 = vunpack.c.l.b16 %v872
        %v1242 = vunpack.c.l.b16 %v873
        %v1243 = vunpack.c.l.b16 %v874
        %v1244 = vunpack.c.l.b16 %v875
        %v1245 = vunpack.c.l.b16 %v876
        %v1246 = vunpack.c.l.b16 %v877
        %v1247 = vunpack.c.l.b16 %v878
        %v1248 = vunpack.c.l.b16 %v879
        %v1249 = vunpack.c.l.b16 %v880
        %v1250 = vunpack.c.l.b16 %v881
        %v1251 = vunpack.c.l.b16 %v882
        %v1252 = vpack.c.b16 %v1237, %v1236
        %v1253 = vpack.c.b16 %v1239, %v1238
        %v1254 = vpack.c.b16 %v1241, %v1240
        %v1255 = vpack.c.b16 %v1243, %v1242
        %v1256 = vpack.c.b16 %v1245, %v1244
        %v1257 = vpack.c.b16 %v1247, %v1246
        %v1258 = vpack.c.b16 %v1249, %v1248
        %v1259 = vpack.c.b16 %v1251, %v1250
        %1268 = vmatprep.subr.bf16.mxu0 0
        %1269 = vmatpush1.bf16.msra.mxu0 %v1252
        %1270 = vmatprep.subr.bf16.mxu0 0
        %1271 = vmatpush1.bf16.msra.mxu0 %v1253
        %1272 = vmatprep.subr.bf16.mxu0 0
        %1273 = vmatpush1.bf16.msra.mxu0 %v1254
        %1274 = vmatprep.subr.bf16.mxu0 0
        %1275 = vmatpush1.bf16.msra.mxu0 %v1255
        %1276 = vmatprep.subr.bf16.mxu0 0
        %1277 = vmatpush1.bf16.msra.mxu0 %v1256
        %1278 = vmatprep.subr.bf16.mxu0 0
        %1279 = vmatpush1.bf16.msra.mxu0 %v1257
        %1280 = vmatprep.subr.bf16.mxu0 0
        %1281 = vmatpush1.bf16.msra.mxu0 %v1258
        %1282 = vmatprep.subr.bf16.mxu0 0
        %1283 = vmatpush1.bf16.msra.mxu0 %v1259
        %1284 = vmatprep.subr.bf16.mxu0 0
        %1285 = vmatpush1.bf16.msra.mxu0 0
        %1286 = vmatprep.subr.bf16.mxu0 0
        %1287 = vmatpush1.bf16.msra.mxu0 0
        %1288 = vmatprep.subr.bf16.mxu0 0
        %1289 = vmatpush1.bf16.msra.mxu0 0
        %1290 = vmatprep.subr.bf16.mxu0 0
        %1291 = vmatpush1.bf16.msra.mxu0 0
        %1292 = vmatprep.subr.bf16.mxu0 0
        %1293 = vmatpush1.bf16.msra.mxu0 0
        %1294 = vmatprep.subr.bf16.mxu0 0
        %1295 = vmatpush1.bf16.msra.mxu0 0
        %1296 = vmatprep.subr.bf16.mxu0 0
        %1297 = vmatpush1.bf16.msra.mxu0 0
        %1298 = vmatprep.subr.bf16.mxu0 0
        %1299 = vmatpush1.bf16.msra.mxu0 0
        %1300 = vmatprep.mubr.bf16.mxu0 0
        %1301 = vmatmul.mubr.bf16.gmra.mrb[0].mxu0 %v1188
        %v1302 = vpop.f32.mrb[0].mxu0
        %v1303 = vadd.f32 %v998, %v1302
        %v1304 = vpop.f32.mrb[0].mxu0
        %v1305 = vpop.f32.mrb[0].mxu0
        %v1306 = vadd.f32 %v1001, %v1305
        %v1307 = vpop.f32.mrb[0].mxu0
        %1308 = vmatprep.mubr.bf16.mxu0 0
        %1309 = vmatmul.mubr.bf16.gmra.mrb[0].mxu0 %v1189
        %v1310 = vpop.f32.mrb[0].mxu0
        %v1311 = vadd.f32 %v1006, %v1310
        %v1312 = vpop.f32.mrb[0].mxu0
        %v1313 = vpop.f32.mrb[0].mxu0
        %v1314 = vadd.f32 %v1009, %v1313
        %v1315 = vpop.f32.mrb[0].mxu0
        %1316 = vmatprep.mubr.bf16.mxu0 0
        %1317 = vmatmul.mubr.bf16.gmra.mrb[0].mxu0 %v1190
        %v1318 = vpop.f32.mrb[0].mxu0
        %v1319 = vadd.f32 %v1014, %v1318
        %v1320 = vpop.f32.mrb[0].mxu0
        %v1321 = vpop.f32.mrb[0].mxu0
        %v1322 = vadd.f32 %v1017, %v1321
        %v1323 = vpop.f32.mrb[0].mxu0
        %1324 = vmatprep.mubr.bf16.mxu0 0
        %1325 = vmatmul.mubr.bf16.gmra.mrb[0].mxu0 %v1191
        %v1326 = vpop.f32.mrb[0].mxu0
        %v1327 = vadd.f32 %v1022, %v1326
        %v1328 = vpop.f32.mrb[0].mxu0
        %v1329 = vpop.f32.mrb[0].mxu0
        %v1330 = vadd.f32 %v1025, %v1329
        %v1331 = vpop.f32.mrb[0].mxu0
        %1332 = vmatprep.mubr.bf16.mxu0 0
        %1333 = vmatmul.mubr.bf16.gmra.mrb[0].mxu0 %v1192
        %v1334 = vpop.f32.mrb[0].mxu0
        %v1335 = vadd.f32 %v1030, %v1334
        %v1336 = vpop.f32.mrb[0].mxu0
        %v1337 = vpop.f32.mrb[0].mxu0
        %v1338 = vadd.f32 %v1033, %v1337
        %v1339 = vpop.f32.mrb[0].mxu0
        %1340 = vmatprep.mubr.bf16.mxu0 0
        %1341 = vmatmul.mubr.bf16.gmra.mrb[0].mxu0 %v1193
        %v1342 = vpop.f32.mrb[0].mxu0
        %v1343 = vadd.f32 %v1038, %v1342
        %v1344 = vpop.f32.mrb[0].mxu0
        %v1345 = vpop.f32.mrb[0].mxu0
        %v1346 = vadd.f32 %v1041, %v1345
        %v1347 = vpop.f32.mrb[0].mxu0
        %1348 = vmatprep.mubr.bf16.mxu0 0
        %1349 = vmatmul.mubr.bf16.gmra.mrb[0].mxu0 %v1194
        %v1350 = vpop.f32.mrb[0].mxu0
        %v1351 = vadd.f32 %v1046, %v1350
        %v1352 = vpop.f32.mrb[0].mxu0
        %v1353 = vpop.f32.mrb[0].mxu0
        %v1354 = vadd.f32 %v1049, %v1353
        %v1355 = vpop.f32.mrb[0].mxu0
        %1356 = vmatprep.mubr.bf16.mxu0 0
        %1357 = vmatmul.mubr.bf16.gmra.mrb[0].mxu0 %v1195
        %v1358 = vpop.f32.mrb[0].mxu0
        %v1359 = vadd.f32 %v1054, %v1358
        %v1360 = vpop.f32.mrb[0].mxu0
        %v1361 = vpop.f32.mrb[0].mxu0
        %v1362 = vadd.f32 %v1057, %v1361
        %v1363 = vpop.f32.mrb[0].mxu0
        %1364 = vmatprep.mubr.bf16.mxu0 0
        %1365 = vmatmul.mubr.bf16.gmra.mrb[0].mxu0 %v1196
        %v1366 = vpop.f32.mrb[0].mxu0
        %v1367 = vadd.f32 %v1062, %v1366
        %v1368 = vpop.f32.mrb[0].mxu0
        %v1369 = vpop.f32.mrb[0].mxu0
        %v1370 = vadd.f32 %v1065, %v1369
        %v1371 = vpop.f32.mrb[0].mxu0
        %1372 = vmatprep.mubr.bf16.mxu0 0
        %1373 = vmatmul.mubr.bf16.gmra.mrb[0].mxu0 %v1197
        %v1374 = vpop.f32.mrb[0].mxu0
        %v1375 = vadd.f32 %v1070, %v1374
        %v1376 = vpop.f32.mrb[0].mxu0
        %v1377 = vpop.f32.mrb[0].mxu0
        %v1378 = vadd.f32 %v1073, %v1377
        %v1379 = vpop.f32.mrb[0].mxu0
        %1380 = vmatprep.mubr.bf16.mxu0 0
        %1381 = vmatmul.mubr.bf16.gmra.mrb[0].mxu0 %v1198
        %v1382 = vpop.f32.mrb[0].mxu0
        %v1383 = vadd.f32 %v1078, %v1382
        %v1384 = vpop.f32.mrb[0].mxu0
        %v1385 = vpop.f32.mrb[0].mxu0
        %v1386 = vadd.f32 %v1081, %v1385
        %v1387 = vpop.f32.mrb[0].mxu0
        %1388 = vmatprep.mubr.bf16.mxu0 0
        %1389 = vmatmul.mubr.bf16.gmra.mrb[0].mxu0 %v1199
        %v1390 = vpop.f32.mrb[0].mxu0
        %v1391 = vadd.f32 %v1086, %v1390
        %v1392 = vpop.f32.mrb[0].mxu0
        %v1393 = vpop.f32.mrb[0].mxu0
        %v1394 = vadd.f32 %v1089, %v1393
        %v1395 = vpop.f32.mrb[0].mxu0
        %1396 = vmatprep.mubr.bf16.mxu0 0
        %1397 = vmatmul.mubr.bf16.gmra.mrb[0].mxu0 %v1200
        %v1398 = vpop.f32.mrb[0].mxu0
        %v1399 = vadd.f32 %v1094, %v1398
        %v1400 = vpop.f32.mrb[0].mxu0
        %v1401 = vpop.f32.mrb[0].mxu0
        %v1402 = vadd.f32 %v1097, %v1401
        %v1403 = vpop.f32.mrb[0].mxu0
        %1404 = vmatprep.mubr.bf16.mxu0 0
        %1405 = vmatmul.mubr.bf16.gmra.mrb[0].mxu0 %v1201
        %v1406 = vpop.f32.mrb[0].mxu0
        %v1407 = vadd.f32 %v1102, %v1406
        %v1408 = vpop.f32.mrb[0].mxu0
        %v1409 = vpop.f32.mrb[0].mxu0
        %v1410 = vadd.f32 %v1105, %v1409
        %v1411 = vpop.f32.mrb[0].mxu0
        %1412 = vmatprep.mubr.bf16.mxu0 0
        %1413 = vmatmul.mubr.bf16.gmra.mrb[0].mxu0 %v1202
        %v1414 = vpop.f32.mrb[0].mxu0
        %v1415 = vadd.f32 %v1110, %v1414
        %v1416 = vpop.f32.mrb[0].mxu0
        %v1417 = vpop.f32.mrb[0].mxu0
        %v1418 = vadd.f32 %v1113, %v1417
        %v1419 = vpop.f32.mrb[0].mxu0
        %1420 = vmatprep.mubr.bf16.mxu0 0
        %1421 = vmatmul.mubr.bf16.gmra.mrb[0].mxu0 %v1203
        %v1422 = vpop.f32.mrb[0].mxu0
        %v1423 = vadd.f32 %v1118, %v1422
        %v1424 = vpop.f32.mrb[0].mxu0
        %v1425 = vpop.f32.mrb[0].mxu0
        %v1426 = vadd.f32 %v1121, %v1425
        %v1427 = vpop.f32.mrb[0].mxu0
        %1428 = vdwg.mxu0
        %v1429 = vld [vmem:[%s7] sm:$0x1]
        %v1431 = vlaneseq
        %v1432 = vshrl.u32 %v1431, 7
        %v1433 = vsub.s32 0, %v1432
        %v1434 = vrot.slane %v1429, %v1433
        %v1436 = vadd.f32 %v1303, %v1434
        %v1437 = vadd.f32 %v1306, %v1434
        %v1438 = vadd.f32 %v1311, %v1434
        %v1439 = vadd.f32 %v1314, %v1434
        %v1440 = vadd.f32 %v1319, %v1434
        %v1441 = vadd.f32 %v1322, %v1434
        %v1442 = vadd.f32 %v1327, %v1434
        %v1443 = vadd.f32 %v1330, %v1434
        %v1444 = vadd.f32 %v1335, %v1434
        %v1445 = vadd.f32 %v1338, %v1434
        %v1446 = vadd.f32 %v1343, %v1434
        %v1447 = vadd.f32 %v1346, %v1434
        %v1448 = vadd.f32 %v1351, %v1434
        %v1449 = vadd.f32 %v1354, %v1434
        %v1450 = vadd.f32 %v1359, %v1434
        %v1451 = vadd.f32 %v1362, %v1434
        %v1452 = vadd.f32 %v1367, %v1434
        %v1453 = vadd.f32 %v1370, %v1434
        %v1454 = vadd.f32 %v1375, %v1434
        %v1455 = vadd.f32 %v1378, %v1434
        %v1456 = vadd.f32 %v1383, %v1434
        %v1457 = vadd.f32 %v1386, %v1434
        %v1458 = vadd.f32 %v1391, %v1434
        %v1459 = vadd.f32 %v1394, %v1434
        %v1460 = vadd.f32 %v1399, %v1434
        %v1461 = vadd.f32 %v1402, %v1434
        %v1462 = vadd.f32 %v1407, %v1434
        %v1463 = vadd.f32 %v1410, %v1434
        %v1464 = vadd.f32 %v1415, %v1434
        %v1465 = vadd.f32 %v1418, %v1434
        %v1466 = vadd.f32 %v1423, %v1434
        %v1467 = vadd.f32 %v1426, %v1434
        %v1468 = vmax.f32 %v1436, 0.0
        %v1469 = vmax.f32 %v1437, 0.0
        %v1470 = vmax.f32 %v1438, 0.0
        %v1471 = vmax.f32 %v1439, 0.0
        %v1472 = vmax.f32 %v1440, 0.0
        %v1473 = vmax.f32 %v1441, 0.0
        %v1474 = vmax.f32 %v1442, 0.0
        %v1475 = vmax.f32 %v1443, 0.0
        %v1476 = vmax.f32 %v1444, 0.0
        %v1477 = vmax.f32 %v1445, 0.0
        %v1478 = vmax.f32 %v1446, 0.0
        %v1479 = vmax.f32 %v1447, 0.0
        %v1480 = vmax.f32 %v1448, 0.0
        %v1481 = vmax.f32 %v1449, 0.0
        %v1482 = vmax.f32 %v1450, 0.0
        %v1483 = vmax.f32 %v1451, 0.0
        %v1484 = vmax.f32 %v1452, 0.0
        %v1485 = vmax.f32 %v1453, 0.0
        %v1486 = vmax.f32 %v1454, 0.0
        %v1487 = vmax.f32 %v1455, 0.0
        %v1488 = vmax.f32 %v1456, 0.0
        %v1489 = vmax.f32 %v1457, 0.0
        %v1490 = vmax.f32 %v1458, 0.0
        %v1491 = vmax.f32 %v1459, 0.0
        %v1492 = vmax.f32 %v1460, 0.0
        %v1493 = vmax.f32 %v1461, 0.0
        %v1494 = vmax.f32 %v1462, 0.0
        %v1495 = vmax.f32 %v1463, 0.0
        %v1496 = vmax.f32 %v1464, 0.0
        %v1497 = vmax.f32 %v1465, 0.0
        %v1498 = vmax.f32 %v1466, 0.0
        %v1499 = vmax.f32 %v1467, 0.0
        %s1500 = sld [smem:[#allocation2]]
        %v1501 = vpack.c.bf16 %v1469, %v1468
        %v1502 = vpack.c.bf16 %v1471, %v1470
        %v1503 = vpack.c.bf16 %v1473, %v1472
        %v1504 = vpack.c.bf16 %v1475, %v1474
        %v1505 = vpack.c.bf16 %v1477, %v1476
        %v1506 = vpack.c.bf16 %v1479, %v1478
        %v1507 = vpack.c.bf16 %v1481, %v1480
        %v1508 = vpack.c.bf16 %v1483, %v1482
        %v1509 = vpack.c.bf16 %v1485, %v1484
        %v1510 = vpack.c.bf16 %v1487, %v1486
        %v1511 = vpack.c.bf16 %v1489, %v1488
        %v1512 = vpack.c.bf16 %v1491, %v1490
        %v1513 = vpack.c.bf16 %v1493, %v1492
        %v1514 = vpack.c.bf16 %v1495, %v1494
        %v1515 = vpack.c.bf16 %v1497, %v1496
        %v1516 = vpack.c.bf16 %v1499, %v1498
        %v1517 = vld [vmem:[#allocation12] sm:$0xf]
        %v1518 = vld [vmem:[#allocation12 + $0x4] sm:$0xf]
        %v1519 = vld [vmem:[#allocation12 + $0x8] sm:$0xf]
        %v1520 = vld [vmem:[#allocation12 + $0xc] sm:$0xf]
        %v1521 = vld [vmem:[#allocation12 + $0x10] sm:$0xf]
        %v1522 = vld [vmem:[#allocation12 + $0x14] sm:$0xf]
        %v1523 = vld [vmem:[#allocation12 + $0x18] sm:$0xf]
        %v1524 = vld [vmem:[#allocation12 + $0x1c] sm:$0xf]
        %v1525 = vld [vmem:[#allocation12 + $0x20] sm:$0xf]
        %v1526 = vld [vmem:[#allocation12 + $0x24] sm:$0xf]
        %v1527 = vld [vmem:[#allocation12 + $0x28] sm:$0xf]
        %v1528 = vld [vmem:[#allocation12 + $0x2c] sm:$0xf]
        %v1529 = vld [vmem:[#allocation12 + $0x30] sm:$0xf]
        %v1530 = vld [vmem:[#allocation12 + $0x34] sm:$0xf]
        %v1531 = vld [vmem:[#allocation12 + $0x38] sm:$0xf]
        %v1532 = vld [vmem:[#allocation12 + $0x3c] sm:$0xf]
        %v1533 = vld [vmem:[%s9] sm:$0x1]
        %v1535 = vlaneseq
        %v1536 = vshrl.u32 %v1535, 7
        %v1537 = vsub.s32 0, %v1536
        %v1538 = vrot.slane %v1533, %v1537
        %v1556 = vunpack.c.l.b16 %v1517
        %v1557 = vunpack.c.l.b16 %v1518
        %v1558 = vunpack.c.l.b16 %v1519
        %v1559 = vunpack.c.l.b16 %v1520
        %v1560 = vunpack.c.l.b16 %v1521
        %v1561 = vunpack.c.l.b16 %v1522
        %v1562 = vunpack.c.l.b16 %v1523
        %v1563 = vunpack.c.l.b16 %v1524
        %v1564 = vunpack.c.l.b16 %v1525
        %v1565 = vunpack.c.l.b16 %v1526
        %v1566 = vunpack.c.l.b16 %v1527
        %v1567 = vunpack.c.l.b16 %v1528
        %v1568 = vunpack.c.l.b16 %v1529
        %v1569 = vunpack.c.l.b16 %v1530
        %v1570 = vunpack.c.l.b16 %v1531
        %v1571 = vunpack.c.l.b16 %v1532
        %v1572 = vpack.c.b16 %v1557, %v1556
        %v1573 = vpack.c.b16 %v1559, %v1558
        %v1574 = vpack.c.b16 %v1561, %v1560
        %v1575 = vpack.c.b16 %v1563, %v1562
        %v1576 = vpack.c.b16 %v1565, %v1564
        %v1577 = vpack.c.b16 %v1567, %v1566
        %v1578 = vpack.c.b16 %v1569, %v1568
        %v1579 = vpack.c.b16 %v1571, %v1570
        %1588 = vmatprep.subr.bf16.mxu0 0
        %1589 = vmatpush1.bf16.msra.mxu0 %v1572
        %1590 = vmatprep.subr.bf16.mxu0 0
        %1591 = vmatpush1.bf16.msra.mxu0 %v1573
        %1592 = vmatprep.subr.bf16.mxu0 0
        %1593 = vmatpush1.bf16.msra.mxu0 %v1574
        %1594 = vmatprep.subr.bf16.mxu0 0
        %1595 = vmatpush1.bf16.msra.mxu0 %v1575
        %1596 = vmatprep.subr.bf16.mxu0 0
        %1597 = vmatpush1.bf16.msra.mxu0 %v1576
        %1598 = vmatprep.subr.bf16.mxu0 0
        %1599 = vmatpush1.bf16.msra.mxu0 %v1577
        %1600 = vmatprep.subr.bf16.mxu0 0
        %1601 = vmatpush1.bf16.msra.mxu0 %v1578
        %1602 = vmatprep.subr.bf16.mxu0 0
        %1603 = vmatpush1.bf16.msra.mxu0 %v1579
        %1604 = vmatprep.subr.bf16.mxu0 0
        %1605 = vmatpush1.bf16.msra.mxu0 0
        %1606 = vmatprep.subr.bf16.mxu0 0
        %1607 = vmatpush1.bf16.msra.mxu0 0
        %1608 = vmatprep.subr.bf16.mxu0 0
        %1609 = vmatpush1.bf16.msra.mxu0 0
        %1610 = vmatprep.subr.bf16.mxu0 0
        %1611 = vmatpush1.bf16.msra.mxu0 0
        %1612 = vmatprep.subr.bf16.mxu0 0
        %1613 = vmatpush1.bf16.msra.mxu0 0
        %1614 = vmatprep.subr.bf16.mxu0 0
        %1615 = vmatpush1.bf16.msra.mxu0 0
        %1616 = vmatprep.subr.bf16.mxu0 0
        %1617 = vmatpush1.bf16.msra.mxu0 0
        %1618 = vmatprep.subr.bf16.mxu0 0
        %1619 = vmatpush1.bf16.msra.mxu0 0
        %1620 = vmatprep.mubr.bf16.mxu0 0
        %1621 = vmatmul.mubr.bf16.gmra.mrb[0].mxu0 %v1501
        %v1622 = vpop.f32.mrb[0].mxu0
        %v1623 = vadd.f32 %v1538, %v1622
        %v1624 = vpop.f32.mrb[0].mxu0
        %v1625 = vpop.f32.mrb[0].mxu0
        %v1626 = vadd.f32 %v1538, %v1625
        %v1627 = vpop.f32.mrb[0].mxu0
        %1628 = vmatprep.mubr.bf16.mxu0 0
        %1629 = vmatmul.mubr.bf16.gmra.mrb[0].mxu0 %v1502
        %v1630 = vpop.f32.mrb[0].mxu0
        %v1631 = vadd.f32 %v1538, %v1630
        %v1632 = vpop.f32.mrb[0].mxu0
        %v1633 = vpop.f32.mrb[0].mxu0
        %v1634 = vadd.f32 %v1538, %v1633
        %v1635 = vpop.f32.mrb[0].mxu0
        %1636 = vmatprep.mubr.bf16.mxu0 0
        %1637 = vmatmul.mubr.bf16.gmra.mrb[0].mxu0 %v1503
        %v1638 = vpop.f32.mrb[0].mxu0
        %v1639 = vadd.f32 %v1538, %v1638
        %v1640 = vpop.f32.mrb[0].mxu0
        %v1641 = vpop.f32.mrb[0].mxu0
        %v1642 = vadd.f32 %v1538, %v1641
        %v1643 = vpop.f32.mrb[0].mxu0
        %1644 = vmatprep.mubr.bf16.mxu0 0
        %1645 = vmatmul.mubr.bf16.gmra.mrb[0].mxu0 %v1504
        %v1646 = vpop.f32.mrb[0].mxu0
        %v1647 = vadd.f32 %v1538, %v1646
        %v1648 = vpop.f32.mrb[0].mxu0
        %v1649 = vpop.f32.mrb[0].mxu0
        %v1650 = vadd.f32 %v1538, %v1649
        %v1651 = vpop.f32.mrb[0].mxu0
        %1652 = vmatprep.mubr.bf16.mxu0 0
        %1653 = vmatmul.mubr.bf16.gmra.mrb[0].mxu0 %v1505
        %v1654 = vpop.f32.mrb[0].mxu0
        %v1655 = vadd.f32 %v1538, %v1654
        %v1656 = vpop.f32.mrb[0].mxu0
        %v1657 = vpop.f32.mrb[0].mxu0
        %v1658 = vadd.f32 %v1538, %v1657
        %v1659 = vpop.f32.mrb[0].mxu0
        %1660 = vmatprep.mubr.bf16.mxu0 0
        %1661 = vmatmul.mubr.bf16.gmra.mrb[0].mxu0 %v1506
        %v1662 = vpop.f32.mrb[0].mxu0
        %v1663 = vadd.f32 %v1538, %v1662
        %v1664 = vpop.f32.mrb[0].mxu0
        %v1665 = vpop.f32.mrb[0].mxu0
        %v1666 = vadd.f32 %v1538, %v1665
        %v1667 = vpop.f32.mrb[0].mxu0
        %1668 = vmatprep.mubr.bf16.mxu0 0
        %1669 = vmatmul.mubr.bf16.gmra.mrb[0].mxu0 %v1507
        %v1670 = vpop.f32.mrb[0].mxu0
        %v1671 = vadd.f32 %v1538, %v1670
        %v1672 = vpop.f32.mrb[0].mxu0
        %v1673 = vpop.f32.mrb[0].mxu0
        %v1674 = vadd.f32 %v1538, %v1673
        %v1675 = vpop.f32.mrb[0].mxu0
        %1676 = vmatprep.mubr.bf16.mxu0 0
        %1677 = vmatmul.mubr.bf16.gmra.mrb[0].mxu0 %v1508
        %v1678 = vpop.f32.mrb[0].mxu0
        %v1679 = vadd.f32 %v1538, %v1678
        %v1680 = vpop.f32.mrb[0].mxu0
        %v1681 = vpop.f32.mrb[0].mxu0
        %v1682 = vadd.f32 %v1538, %v1681
        %v1683 = vpop.f32.mrb[0].mxu0
        %1684 = vmatprep.mubr.bf16.mxu0 0
        %1685 = vmatmul.mubr.bf16.gmra.mrb[0].mxu0 %v1509
        %v1686 = vpop.f32.mrb[0].mxu0
        %v1687 = vadd.f32 %v1538, %v1686
        %v1688 = vpop.f32.mrb[0].mxu0
        %v1689 = vpop.f32.mrb[0].mxu0
        %v1690 = vadd.f32 %v1538, %v1689
        %v1691 = vpop.f32.mrb[0].mxu0
        %1692 = vmatprep.mubr.bf16.mxu0 0
        %1693 = vmatmul.mubr.bf16.gmra.mrb[0].mxu0 %v1510
        %v1694 = vpop.f32.mrb[0].mxu0
        %v1695 = vadd.f32 %v1538, %v1694
        %v1696 = vpop.f32.mrb[0].mxu0
        %v1697 = vpop.f32.mrb[0].mxu0
        %v1698 = vadd.f32 %v1538, %v1697
        %v1699 = vpop.f32.mrb[0].mxu0
        %1700 = vmatprep.mubr.bf16.mxu0 0
        %1701 = vmatmul.mubr.bf16.gmra.mrb[0].mxu0 %v1511
        %v1702 = vpop.f32.mrb[0].mxu0
        %v1703 = vadd.f32 %v1538, %v1702
        %v1704 = vpop.f32.mrb[0].mxu0
        %v1705 = vpop.f32.mrb[0].mxu0
        %v1706 = vadd.f32 %v1538, %v1705
        %v1707 = vpop.f32.mrb[0].mxu0
        %1708 = vmatprep.mubr.bf16.mxu0 0
        %1709 = vmatmul.mubr.bf16.gmra.mrb[0].mxu0 %v1512
        %v1710 = vpop.f32.mrb[0].mxu0
        %v1711 = vadd.f32 %v1538, %v1710
        %v1712 = vpop.f32.mrb[0].mxu0
        %v1713 = vpop.f32.mrb[0].mxu0
        %v1714 = vadd.f32 %v1538, %v1713
        %v1715 = vpop.f32.mrb[0].mxu0
        %1716 = vmatprep.mubr.bf16.mxu0 0
        %1717 = vmatmul.mubr.bf16.gmra.mrb[0].mxu0 %v1513
        %v1718 = vpop.f32.mrb[0].mxu0
        %v1719 = vadd.f32 %v1538, %v1718
        %v1720 = vpop.f32.mrb[0].mxu0
        %v1721 = vpop.f32.mrb[0].mxu0
        %v1722 = vadd.f32 %v1538, %v1721
        %v1723 = vpop.f32.mrb[0].mxu0
        %1724 = vmatprep.mubr.bf16.mxu0 0
        %1725 = vmatmul.mubr.bf16.gmra.mrb[0].mxu0 %v1514
        %v1726 = vpop.f32.mrb[0].mxu0
        %v1727 = vadd.f32 %v1538, %v1726
        %v1728 = vpop.f32.mrb[0].mxu0
        %v1729 = vpop.f32.mrb[0].mxu0
        %v1730 = vadd.f32 %v1538, %v1729
        %v1731 = vpop.f32.mrb[0].mxu0
        %1732 = vmatprep.mubr.bf16.mxu0 0
        %1733 = vmatmul.mubr.bf16.gmra.mrb[0].mxu0 %v1515
        %v1734 = vpop.f32.mrb[0].mxu0
        %v1735 = vadd.f32 %v1538, %v1734
        %v1736 = vpop.f32.mrb[0].mxu0
        %v1737 = vpop.f32.mrb[0].mxu0
        %v1738 = vadd.f32 %v1538, %v1737
        %v1739 = vpop.f32.mrb[0].mxu0
        %1740 = vmatprep.mubr.bf16.mxu0 0
        %1741 = vmatmul.mubr.bf16.gmra.mrb[0].mxu0 %v1516
        %v1742 = vpop.f32.mrb[0].mxu0
        %v1743 = vadd.f32 %v1538, %v1742
        %v1744 = vpop.f32.mrb[0].mxu0
        %v1745 = vpop.f32.mrb[0].mxu0
        %v1746 = vadd.f32 %v1538, %v1745
        %v1747 = vpop.f32.mrb[0].mxu0
        %1748 = vdwg.mxu0
        %v1749 = vstv %s1500
        %v1750 = vmul.f32 %v1623, %v1749
        %v1751 = vmul.f32 %v1626, %v1749
        %v1752 = vmul.f32 %v1631, %v1749
        %v1753 = vmul.f32 %v1634, %v1749
        %v1754 = vmul.f32 %v1639, %v1749
        %v1755 = vmul.f32 %v1642, %v1749
        %v1756 = vmul.f32 %v1647, %v1749
        %v1757 = vmul.f32 %v1650, %v1749
        %v1758 = vmul.f32 %v1655, %v1749
        %v1759 = vmul.f32 %v1658, %v1749
        %v1760 = vmul.f32 %v1663, %v1749
        %v1761 = vmul.f32 %v1666, %v1749
        %v1762 = vmul.f32 %v1671, %v1749
        %v1763 = vmul.f32 %v1674, %v1749
        %v1764 = vmul.f32 %v1679, %v1749
        %v1765 = vmul.f32 %v1682, %v1749
        %v1766 = vmul.f32 %v1687, %v1749
        %v1767 = vmul.f32 %v1690, %v1749
        %v1768 = vmul.f32 %v1695, %v1749
        %v1769 = vmul.f32 %v1698, %v1749
        %v1770 = vmul.f32 %v1703, %v1749
        %v1771 = vmul.f32 %v1706, %v1749
        %v1772 = vmul.f32 %v1711, %v1749
        %v1773 = vmul.f32 %v1714, %v1749
        %v1774 = vmul.f32 %v1719, %v1749
        %v1775 = vmul.f32 %v1722, %v1749
        %v1776 = vmul.f32 %v1727, %v1749
        %v1777 = vmul.f32 %v1730, %v1749
        %v1778 = vmul.f32 %v1735, %v1749
        %v1779 = vmul.f32 %v1738, %v1749
        %v1780 = vmul.f32 %v1743, %v1749
        %v1781 = vmul.f32 %v1746, %v1749
        %v1782 = vadd.f32 %v523, %v1750
        %v1783 = vadd.f32 %v524, %v1751
        %v1784 = vadd.f32 %v525, %v1752
        %v1785 = vadd.f32 %v526, %v1753
        %v1786 = vadd.f32 %v527, %v1754
        %v1787 = vadd.f32 %v528, %v1755
        %v1788 = vadd.f32 %v529, %v1756
        %v1789 = vadd.f32 %v530, %v1757
        %v1790 = vadd.f32 %v531, %v1758
        %v1791 = vadd.f32 %v532, %v1759
        %v1792 = vadd.f32 %v533, %v1760
        %v1793 = vadd.f32 %v534, %v1761
        %v1794 = vadd.f32 %v535, %v1762
        %v1795 = vadd.f32 %v536, %v1763
        %v1796 = vadd.f32 %v537, %v1764
        %v1797 = vadd.f32 %v538, %v1765
        %v1798 = vadd.f32 %v539, %v1766
        %v1799 = vadd.f32 %v540, %v1767
        %v1800 = vadd.f32 %v541, %v1768
        %v1801 = vadd.f32 %v542, %v1769
        %v1802 = vadd.f32 %v543, %v1770
        %v1803 = vadd.f32 %v544, %v1771
        %v1804 = vadd.f32 %v545, %v1772
        %v1805 = vadd.f32 %v546, %v1773
        %v1806 = vadd.f32 %v547, %v1774
        %v1807 = vadd.f32 %v548, %v1775
        %v1808 = vadd.f32 %v549, %v1776
        %v1809 = vadd.f32 %v550, %v1777
        %v1810 = vadd.f32 %v551, %v1778
        %v1811 = vadd.f32 %v552, %v1779
        %v1812 = vadd.f32 %v553, %v1780
        %v1813 = vadd.f32 %v554, %v1781
        %v1814 = vpack.c.bf16 %v1783, %v1782
        %v1815 = vpack.c.bf16 %v1785, %v1784
        %v1816 = vpack.c.bf16 %v1787, %v1786
        %v1817 = vpack.c.bf16 %v1789, %v1788
        %v1818 = vpack.c.bf16 %v1791, %v1790
        %v1819 = vpack.c.bf16 %v1793, %v1792
        %v1820 = vpack.c.bf16 %v1795, %v1794
        %v1821 = vpack.c.bf16 %v1797, %v1796
        %v1822 = vpack.c.bf16 %v1799, %v1798
        %v1823 = vpack.c.bf16 %v1801, %v1800
        %v1824 = vpack.c.bf16 %v1803, %v1802
        %v1825 = vpack.c.bf16 %v1805, %v1804
        %v1826 = vpack.c.bf16 %v1807, %v1806
        %v1827 = vpack.c.bf16 %v1809, %v1808
        %v1828 = vpack.c.bf16 %v1811, %v1810
        %v1829 = vpack.c.bf16 %v1813, %v1812
        %v1830 = vld [vmem:[#allocation14] sm:$0xf]
        %v1831 = vld [vmem:[#allocation14 + $0x4] sm:$0xf]
        %v1832 = vld [vmem:[#allocation14 + $0x8] sm:$0xf]
        %v1833 = vld [vmem:[#allocation14 + $0xc] sm:$0xf]
        %v1834 = vld [vmem:[#allocation14 + $0x10] sm:$0xf]
        %v1835 = vld [vmem:[#allocation14 + $0x14] sm:$0xf]
        %v1836 = vld [vmem:[#allocation14 + $0x18] sm:$0xf]
        %v1837 = vld [vmem:[#allocation14 + $0x1c] sm:$0xf]
        %v1838 = vld [vmem:[#allocation14 + $0x20] sm:$0xf]
        %v1839 = vld [vmem:[#allocation14 + $0x24] sm:$0xf]
        %v1840 = vld [vmem:[#allocation14 + $0x28] sm:$0xf]
        %v1841 = vld [vmem:[#allocation14 + $0x2c] sm:$0xf]
        %v1842 = vld [vmem:[#allocation14 + $0x30] sm:$0xf]
        %v1843 = vld [vmem:[#allocation14 + $0x34] sm:$0xf]
        %v1844 = vld [vmem:[#allocation14 + $0x38] sm:$0xf]
        %v1845 = vld [vmem:[#allocation14 + $0x3c] sm:$0xf]
        %v1846 = vld [vmem:[%s11] sm:$0x1]
        %v1848 = vlaneseq
        %v1849 = vshrl.u32 %v1848, 7
        %v1850 = vsub.s32 0, %v1849
        %v1851 = vrot.slane %v1846, %v1850
        %v1869 = vunpack.c.l.b16 %v1830
        %v1870 = vunpack.c.l.b16 %v1831
        %v1871 = vunpack.c.l.b16 %v1832
        %v1872 = vunpack.c.l.b16 %v1833
        %v1873 = vunpack.c.l.b16 %v1834
        %v1874 = vunpack.c.l.b16 %v1835
        %v1875 = vunpack.c.l.b16 %v1836
        %v1876 = vunpack.c.l.b16 %v1837
        %v1877 = vunpack.c.l.b16 %v1838
        %v1878 = vunpack.c.l.b16 %v1839
        %v1879 = vunpack.c.l.b16 %v1840
        %v1880 = vunpack.c.l.b16 %v1841
        %v1881 = vunpack.c.l.b16 %v1842
        %v1882 = vunpack.c.l.b16 %v1843
        %v1883 = vunpack.c.l.b16 %v1844
        %v1884 = vunpack.c.l.b16 %v1845
        %v1885 = vpack.c.b16 %v1870, %v1869
        %v1886 = vpack.c.b16 %v1872, %v1871
        %v1887 = vpack.c.b16 %v1874, %v1873
        %v1888 = vpack.c.b16 %v1876, %v1875
        %v1889 = vpack.c.b16 %v1878, %v1877
        %v1890 = vpack.c.b16 %v1880, %v1879
        %v1891 = vpack.c.b16 %v1882, %v1881
        %v1892 = vpack.c.b16 %v1884, %v1883
        %1901 = vmatprep.subr.bf16.mxu0 0
        %1902 = vmatpush1.bf16.msra.mxu0 %v1885
        %1903 = vmatprep.subr.bf16.mxu0 0
        %1904 = vmatpush1.bf16.msra.mxu0 %v1886
        %1905 = vmatprep.subr.bf16.mxu0 0
        %1906 = vmatpush1.bf16.msra.mxu0 %v1887
        %1907 = vmatprep.subr.bf16.mxu0 0
        %1908 = vmatpush1.bf16.msra.mxu0 %v1888
        %1909 = vmatprep.subr.bf16.mxu0 0
        %1910 = vmatpush1.bf16.msra.mxu0 %v1889
        %1911 = vmatprep.subr.bf16.mxu0 0
        %1912 = vmatpush1.bf16.msra.mxu0 %v1890
        %1913 = vmatprep.subr.bf16.mxu0 0
        %1914 = vmatpush1.bf16.msra.mxu0 %v1891
        %1915 = vmatprep.subr.bf16.mxu0 0
        %1916 = vmatpush1.bf16.msra.mxu0 %v1892
        %1917 = vmatprep.subr.bf16.mxu0 0
        %1918 = vmatpush1.bf16.msra.mxu0 0
        %1919 = vmatprep.subr.bf16.mxu0 0
        %1920 = vmatpush1.bf16.msra.mxu0 0
        %1921 = vmatprep.subr.bf16.mxu0 0
        %1922 = vmatpush1.bf16.msra.mxu0 0
        %1923 = vmatprep.subr.bf16.mxu0 0
        %1924 = vmatpush1.bf16.msra.mxu0 0
        %1925 = vmatprep.subr.bf16.mxu0 0
        %1926 = vmatpush1.bf16.msra.mxu0 0
        %1927 = vmatprep.subr.bf16.mxu0 0
        %1928 = vmatpush1.bf16.msra.mxu0 0
        %1929 = vmatprep.subr.bf16.mxu0 0
        %1930 = vmatpush1.bf16.msra.mxu0 0
        %1931 = vmatprep.subr.bf16.mxu0 0
        %1932 = vmatpush1.bf16.msra.mxu0 0
        %1933 = vmatprep.mubr.bf16.mxu0 0
        %1934 = vmatmul.mubr.bf16.gmra.mrb[0].mxu0 %v1814
        %v1935 = vpop.f32.mrb[0].mxu0
        %v1936 = vadd.f32 %v1851, %v1935
        %v1937 = vpop.f32.mrb[0].mxu0
        %v1938 = vpop.f32.mrb[0].mxu0
        %v1939 = vadd.f32 %v1851, %v1938
        %v1940 = vpop.f32.mrb[0].mxu0
        %1941 = vmatprep.mubr.bf16.mxu0 0
        %1942 = vmatmul.mubr.bf16.gmra.mrb[0].mxu0 %v1815
        %v1943 = vpop.f32.mrb[0].mxu0
        %v1944 = vadd.f32 %v1851, %v1943
        %v1945 = vpop.f32.mrb[0].mxu0
        %v1946 = vpop.f32.mrb[0].mxu0
        %v1947 = vadd.f32 %v1851, %v1946
        %v1948 = vpop.f32.mrb[0].mxu0
        %1949 = vmatprep.mubr.bf16.mxu0 0
        %1950 = vmatmul.mubr.bf16.gmra.mrb[0].mxu0 %v1816
        %v1951 = vpop.f32.mrb[0].mxu0
        %v1952 = vadd.f32 %v1851, %v1951
        %v1953 = vpop.f32.mrb[0].mxu0
        %v1954 = vpop.f32.mrb[0].mxu0
        %v1955 = vadd.f32 %v1851, %v1954
        %v1956 = vpop.f32.mrb[0].mxu0
        %1957 = vmatprep.mubr.bf16.mxu0 0
        %1958 = vmatmul.mubr.bf16.gmra.mrb[0].mxu0 %v1817
        %v1959 = vpop.f32.mrb[0].mxu0
        %v1960 = vadd.f32 %v1851, %v1959
        %v1961 = vpop.f32.mrb[0].mxu0
        %v1962 = vpop.f32.mrb[0].mxu0
        %v1963 = vadd.f32 %v1851, %v1962
        %v1964 = vpop.f32.mrb[0].mxu0
        %1965 = vmatprep.mubr.bf16.mxu0 0
        %1966 = vmatmul.mubr.bf16.gmra.mrb[0].mxu0 %v1818
        %v1967 = vpop.f32.mrb[0].mxu0
        %v1968 = vadd.f32 %v1851, %v1967
        %v1969 = vpop.f32.mrb[0].mxu0
        %v1970 = vpop.f32.mrb[0].mxu0
        %v1971 = vadd.f32 %v1851, %v1970
        %v1972 = vpop.f32.mrb[0].mxu0
        %1973 = vmatprep.mubr.bf16.mxu0 0
        %1974 = vmatmul.mubr.bf16.gmra.mrb[0].mxu0 %v1819
        %v1975 = vpop.f32.mrb[0].mxu0
        %v1976 = vadd.f32 %v1851, %v1975
        %v1977 = vpop.f32.mrb[0].mxu0
        %v1978 = vpop.f32.mrb[0].mxu0
        %v1979 = vadd.f32 %v1851, %v1978
        %v1980 = vpop.f32.mrb[0].mxu0
        %1981 = vmatprep.mubr.bf16.mxu0 0
        %1982 = vmatmul.mubr.bf16.gmra.mrb[0].mxu0 %v1820
        %v1983 = vpop.f32.mrb[0].mxu0
        %v1984 = vadd.f32 %v1851, %v1983
        %v1985 = vpop.f32.mrb[0].mxu0
        %v1986 = vpop.f32.mrb[0].mxu0
        %v1987 = vadd.f32 %v1851, %v1986
        %v1988 = vpop.f32.mrb[0].mxu0
        %1989 = vmatprep.mubr.bf16.mxu0 0
        %1990 = vmatmul.mubr.bf16.gmra.mrb[0].mxu0 %v1821
        %v1991 = vpop.f32.mrb[0].mxu0
        %v1992 = vadd.f32 %v1851, %v1991
        %v1993 = vpop.f32.mrb[0].mxu0
        %v1994 = vpop.f32.mrb[0].mxu0
        %v1995 = vadd.f32 %v1851, %v1994
        %v1996 = vpop.f32.mrb[0].mxu0
        %1997 = vmatprep.mubr.bf16.mxu0 0
        %1998 = vmatmul.mubr.bf16.gmra.mrb[0].mxu0 %v1822
        %v1999 = vpop.f32.mrb[0].mxu0
        %v2000 = vadd.f32 %v1851, %v1999
        %v2001 = vpop.f32.mrb[0].mxu0
        %v2002 = vpop.f32.mrb[0].mxu0
        %v2003 = vadd.f32 %v1851, %v2002
        %v2004 = vpop.f32.mrb[0].mxu0
        %2005 = vmatprep.mubr.bf16.mxu0 0
        %2006 = vmatmul.mubr.bf16.gmra.mrb[0].mxu0 %v1823
        %v2007 = vpop.f32.mrb[0].mxu0
        %v2008 = vadd.f32 %v1851, %v2007
        %v2009 = vpop.f32.mrb[0].mxu0
        %v2010 = vpop.f32.mrb[0].mxu0
        %v2011 = vadd.f32 %v1851, %v2010
        %v2012 = vpop.f32.mrb[0].mxu0
        %2013 = vmatprep.mubr.bf16.mxu0 0
        %2014 = vmatmul.mubr.bf16.gmra.mrb[0].mxu0 %v1824
        %v2015 = vpop.f32.mrb[0].mxu0
        %v2016 = vadd.f32 %v1851, %v2015
        %v2017 = vpop.f32.mrb[0].mxu0
        %v2018 = vpop.f32.mrb[0].mxu0
        %v2019 = vadd.f32 %v1851, %v2018
        %v2020 = vpop.f32.mrb[0].mxu0
        %2021 = vmatprep.mubr.bf16.mxu0 0
        %2022 = vmatmul.mubr.bf16.gmra.mrb[0].mxu0 %v1825
        %v2023 = vpop.f32.mrb[0].mxu0
        %v2024 = vadd.f32 %v1851, %v2023
        %v2025 = vpop.f32.mrb[0].mxu0
        %v2026 = vpop.f32.mrb[0].mxu0
        %v2027 = vadd.f32 %v1851, %v2026
        %v2028 = vpop.f32.mrb[0].mxu0
        %2029 = vmatprep.mubr.bf16.mxu0 0
        %2030 = vmatmul.mubr.bf16.gmra.mrb[0].mxu0 %v1826
        %v2031 = vpop.f32.mrb[0].mxu0
        %v2032 = vadd.f32 %v1851, %v2031
        %v2033 = vpop.f32.mrb[0].mxu0
        %v2034 = vpop.f32.mrb[0].mxu0
        %v2035 = vadd.f32 %v1851, %v2034
        %v2036 = vpop.f32.mrb[0].mxu0
        %2037 = vmatprep.mubr.bf16.mxu0 0
        %2038 = vmatmul.mubr.bf16.gmra.mrb[0].mxu0 %v1827
        %v2039 = vpop.f32.mrb[0].mxu0
        %v2040 = vadd.f32 %v1851, %v2039
        %v2041 = vpop.f32.mrb[0].mxu0
        %v2042 = vpop.f32.mrb[0].mxu0
        %v2043 = vadd.f32 %v1851, %v2042
        %v2044 = vpop.f32.mrb[0].mxu0
        %2045 = vmatprep.mubr.bf16.mxu0 0
        %2046 = vmatmul.mubr.bf16.gmra.mrb[0].mxu0 %v1828
        %v2047 = vpop.f32.mrb[0].mxu0
        %v2048 = vadd.f32 %v1851, %v2047
        %v2049 = vpop.f32.mrb[0].mxu0
        %v2050 = vpop.f32.mrb[0].mxu0
        %v2051 = vadd.f32 %v1851, %v2050
        %v2052 = vpop.f32.mrb[0].mxu0
        %2053 = vmatprep.mubr.bf16.mxu0 0
        %2054 = vmatmul.mubr.bf16.gmra.mrb[0].mxu0 %v1829
        %v2055 = vpop.f32.mrb[0].mxu0
        %v2056 = vadd.f32 %v1851, %v2055
        %v2057 = vpop.f32.mrb[0].mxu0
        %v2058 = vpop.f32.mrb[0].mxu0
        %v2059 = vadd.f32 %v1851, %v2058
        %v2060 = vpop.f32.mrb[0].mxu0
        %2061 = vdwg.mxu0
        %v2062 = vpack.c.bf16 %v1939, %v1936
        %v2063 = vpack.c.bf16 %v1947, %v1944
        %v2064 = vpack.c.bf16 %v1955, %v1952
        %v2065 = vpack.c.bf16 %v1963, %v1960
        %v2066 = vpack.c.bf16 %v1971, %v1968
        %v2067 = vpack.c.bf16 %v1979, %v1976
        %v2068 = vpack.c.bf16 %v1987, %v1984
        %v2069 = vpack.c.bf16 %v1995, %v1992
        %v2070 = vpack.c.bf16 %v2003, %v2000
        %v2071 = vpack.c.bf16 %v2011, %v2008
        %v2072 = vpack.c.bf16 %v2019, %v2016
        %v2073 = vpack.c.bf16 %v2027, %v2024
        %v2074 = vpack.c.bf16 %v2035, %v2032
        %v2075 = vpack.c.bf16 %v2043, %v2040
        %v2076 = vpack.c.bf16 %v2051, %v2048
        %v2077 = vpack.c.bf16 %v2059, %v2056
        %v2094 = vunpack.c.l.b16 %v2062
        %v2095 = vunpack.c.h.b16 %v2062
        %v2096 = vunpack.c.l.b16 %v2063
        %v2097 = vunpack.c.h.b16 %v2063
        %v2098 = vunpack.c.l.b16 %v2064
        %v2099 = vunpack.c.h.b16 %v2064
        %v2100 = vunpack.c.l.b16 %v2065
        %v2101 = vunpack.c.h.b16 %v2065
        %v2102 = vunpack.c.l.b16 %v2066
        %v2103 = vunpack.c.h.b16 %v2066
        %v2104 = vunpack.c.l.b16 %v2067
        %v2105 = vunpack.c.h.b16 %v2067
        %v2106 = vunpack.c.l.b16 %v2068
        %v2107 = vunpack.c.h.b16 %v2068
        %v2108 = vunpack.c.l.b16 %v2069
        %v2109 = vunpack.c.h.b16 %v2069
        %v2110 = vunpack.c.l.b16 %v2070
        %v2111 = vunpack.c.h.b16 %v2070
        %v2112 = vunpack.c.l.b16 %v2071
        %v2113 = vunpack.c.h.b16 %v2071
        %v2114 = vunpack.c.l.b16 %v2072
        %v2115 = vunpack.c.h.b16 %v2072
        %v2116 = vunpack.c.l.b16 %v2073
        %v2117 = vunpack.c.h.b16 %v2073
        %v2118 = vunpack.c.l.b16 %v2074
        %v2119 = vunpack.c.h.b16 %v2074
        %v2120 = vunpack.c.l.b16 %v2075
        %v2121 = vunpack.c.h.b16 %v2075
        %v2122 = vunpack.c.l.b16 %v2076
        %v2123 = vunpack.c.h.b16 %v2076
        %v2124 = vunpack.c.l.b16 %v2077
        %v2125 = vunpack.c.h.b16 %v2077
        %v2126 = vpack.c.b16 %v2094, %v2094
        %v2127 = vpack.c.b16 %v2095, %v2095
        %v2128 = vpack.c.b16 %v2096, %v2096
        %v2129 = vpack.c.b16 %v2097, %v2097
        %v2130 = vpack.c.b16 %v2098, %v2098
        %v2131 = vpack.c.b16 %v2099, %v2099
        %v2132 = vpack.c.b16 %v2100, %v2100
        %v2133 = vpack.c.b16 %v2101, %v2101
        %v2134 = vpack.c.b16 %v2102, %v2102
        %v2135 = vpack.c.b16 %v2103, %v2103
        %v2136 = vpack.c.b16 %v2104, %v2104
        %v2137 = vpack.c.b16 %v2105, %v2105
        %v2138 = vpack.c.b16 %v2106, %v2106
        %v2139 = vpack.c.b16 %v2107, %v2107
        %v2140 = vpack.c.b16 %v2108, %v2108
        %v2141 = vpack.c.b16 %v2109, %v2109
        %v2142 = vpack.c.b16 %v2110, %v2110
        %v2143 = vpack.c.b16 %v2111, %v2111
        %v2144 = vpack.c.b16 %v2112, %v2112
        %v2145 = vpack.c.b16 %v2113, %v2113
        %v2146 = vpack.c.b16 %v2114, %v2114
        %v2147 = vpack.c.b16 %v2115, %v2115
        %v2148 = vpack.c.b16 %v2116, %v2116
        %v2149 = vpack.c.b16 %v2117, %v2117
        %v2150 = vpack.c.b16 %v2118, %v2118
        %v2151 = vpack.c.b16 %v2119, %v2119
        %v2152 = vpack.c.b16 %v2120, %v2120
        %v2153 = vpack.c.b16 %v2121, %v2121
        %v2154 = vpack.c.b16 %v2122, %v2122
        %v2155 = vpack.c.b16 %v2123, %v2123
        %v2156 = vpack.c.b16 %v2124, %v2124
        %v2157 = vpack.c.b16 %v2125, %v2125
        %2190 = vst [vmem:[%s519] sm:$0xf] %v2126
        %2191 = vst [vmem:[%s519 + $0x4] sm:$0xf] %v2127
        %2192 = vst [vmem:[%s519 + $0x8] sm:$0xf] %v2128
        %2193 = vst [vmem:[%s519 + $0xc] sm:$0xf] %v2129
        %2194 = vst [vmem:[%s519 + $0x10] sm:$0xf] %v2130
        %2195 = vst [vmem:[%s519 + $0x14] sm:$0xf] %v2131
        %2196 = vst [vmem:[%s519 + $0x18] sm:$0xf] %v2132
        %2197 = vst [vmem:[%s519 + $0x1c] sm:$0xf] %v2133
        %2198 = vst [vmem:[%s519 + $0x20] sm:$0xf] %v2134
        %2199 = vst [vmem:[%s519 + $0x24] sm:$0xf] %v2135
        %2200 = vst [vmem:[%s519 + $0x28] sm:$0xf] %v2136
        %2201 = vst [vmem:[%s519 + $0x2c] sm:$0xf] %v2137
        %2202 = vst [vmem:[%s519 + $0x30] sm:$0xf] %v2138
        %2203 = vst [vmem:[%s519 + $0x34] sm:$0xf] %v2139
        %2204 = vst [vmem:[%s519 + $0x38] sm:$0xf] %v2140
        %2205 = vst [vmem:[%s519 + $0x3c] sm:$0xf] %v2141
        %2206 = vst [vmem:[%s519 + $0x40] sm:$0xf] %v2142
        %2207 = vst [vmem:[%s519 + $0x44] sm:$0xf] %v2143
        %2208 = vst [vmem:[%s519 + $0x48] sm:$0xf] %v2144
        %2209 = vst [vmem:[%s519 + $0x4c] sm:$0xf] %v2145
        %2210 = vst [vmem:[%s519 + $0x50] sm:$0xf] %v2146
        %2211 = vst [vmem:[%s519 + $0x54] sm:$0xf] %v2147
        %2212 = vst [vmem:[%s519 + $0x58] sm:$0xf] %v2148
        %2213 = vst [vmem:[%s519 + $0x5c] sm:$0xf] %v2149
        %2214 = vst [vmem:[%s519 + $0x60] sm:$0xf] %v2150
        %2215 = vst [vmem:[%s519 + $0x64] sm:$0xf] %v2151
        %2216 = vst [vmem:[%s519 + $0x68] sm:$0xf] %v2152
        %2217 = vst [vmem:[%s519 + $0x6c] sm:$0xf] %v2153
        %2218 = vst [vmem:[%s519 + $0x70] sm:$0xf] %v2154
        %2219 = vst [vmem:[%s519 + $0x74] sm:$0xf] %v2155
        %2220 = vst [vmem:[%s519 + $0x78] sm:$0xf] %v2156
        %2221 = vst [vmem:[%s519 + $0x7c] sm:$0xf] %v2157
        %s2222 = sand.u32 %s298, 1
        %s2223 = scalar_lea.sflag [#allocation5], %s2222
        %s2224 = sand.u32 %s298, 1
        %s2225 = smul.addr %s2224, 128
        %s2226 = scalar_lea.vmem [#allocation15], %s2225
        // Predicated region
        $region97: #{tpu_custom_call.1} parent=67 // pred_check
          %p2227 = pneg %p308
        $region98: #{tpu_custom_call.1} parent=67 // pred_check_branch
          %2229 = sbr.rel (%p2227) target = $region100
        $region99: #{tpu_custom_call.1} parent=67 // pred_region
          %s2230 = smul.u32 32, %s33
          %s2232 = ssub.s32 2048, 2048
          %2233 = vsyncadd %s2223, %s2232
          %s2234 = smul.addr %s2230, 64
          %s2235 = scalar_lea.hbm %s12, %s2234
          %s2236 = sshll.u32 %s2226, 4
          %s2237 = int_to_ptr.vmem [resolvable:$true] %s2236
          %2242 = dma.vmem_to_hbm [thread:$0]  %s2237, 2048, %s2235, %s2223, 64, 64, 4
        $region100: #{tpu_custom_call.1} parent=67 // pred_fallthru
          _
      $region68: #{tpu_custom_call.1} parent=5 // pred_fallthru
        _
      %p2243 = scmp.le.s32.totalorder 2, %s28
      // Predicated region
      $region101: #{tpu_custom_call.1} parent=5 // pred_check
        %p2244 = pneg %p2243
      $region102: #{tpu_custom_call.1} parent=5 // pred_check_branch
        %2246 = sbr.rel (%p2244) target = $region104
      $region103: #{tpu_custom_call.1} parent=5 // pred_region
        %s2247 = ssub.s32 %s28, 2
        // Predicated region
        $region105: #{tpu_custom_call.1} parent=103 // pred_check
          %p2248 = pneg %p314
        $region106: #{tpu_custom_call.1} parent=103 // pred_check_branch
          %2250 = sbr.rel (%p2248) target = $region108
        $region107: #{tpu_custom_call.1} parent=103 // pred_region
          %s2251 = sand.u32 %s299, 1
          %s2252 = scalar_lea.sflag [#allocation5], %s2251
          %s2253 = sand.u32 %s299, 1
          %s2254 = smul.addr %s2253, 128
          %s2255 = scalar_lea.vmem [#allocation15], %s2254
          %2256 = dma.done %s2252, 2048
        $region108: #{tpu_custom_call.1} parent=103 // pred_fallthru
          _
      $region104: #{tpu_custom_call.1} parent=5 // pred_fallthru
        _
    $region6: #{tpu_custom_call.1} parent=1 // loop_footer
      %s32 = sadd.s32 1, %s28
    $region7: #{tpu_custom_call.1} parent=1 // loop_footer_branch
      %27 = sbr.rel target = $region3
    $region8: #{tpu_custom_call.1} parent=1 // loop_exit
      _
    %2257 = vsyncpa [#allocation4], 1
    %s2258 = scalar_lea.sflag [#allocation4], 1
    %2259 = vsyncpa %s2258, 1
    %2260 = vsyncpa [#allocation7], 1
    %2261 = vsyncpa [#allocation10], 1
    %2262 = vsyncpa [#allocation13], 1
    %2263 = vsyncpa [#allocation5], 1
    %s2264 = scalar_lea.sflag [#allocation5], 1
    %2265 = vsyncpa %s2264, 1

</llo_original>
